<compile_context>
chip_gen: v7x
topology: tpu7x:2x2x1
jax: 0.10.0
libtpu: 0.0.40
codegen_flags: <defaults>
</compile_context>

<pallas_src>
import math
from functools import partial

import jax
import jax.numpy as jnp
from jax import lax
from jax.experimental import pallas as pl
from jax.experimental.pallas import tpu as pltpu


def _mha_kernel(x_ref, wq_ref, bq_ref, wkv_ref, bkv_ref, wo_ref, bo_ref,
                o_ref, kv_ref, q_ref, pv_ref, *, head, tq, kv_chunk, n_real):
    n_pad, c = x_ref.shape
    c_h = c // head
    qi = pl.program_id(1)

    # --- K/V projection for the whole (padded) sequence, once per batch
    #     element, chunked over rows to bound the f32 intermediate. ----------
    @pl.when(qi == 0)
    def _():
        def project_chunk(r, carry):
            row = pl.multiple_of(r * kv_chunk, kv_chunk)
            xc = x_ref[pl.ds(row, kv_chunk), :]                       # (chunk, C) bf16
            kvc = jnp.dot(xc, wkv_ref[...],
                          preferred_element_type=jnp.float32) + bkv_ref[...]
            kv_ref[pl.ds(row, kv_chunk), :] = kvc.astype(jnp.bfloat16)
            return carry

        lax.fori_loop(0, n_pad // kv_chunk, project_chunk, 0, unroll=False)

    # --- Q projection for this query tile only (1/sqrt(c_h) pre-folded). ----
    q_start = pl.multiple_of(qi * tq, tq)
    xq = x_ref[pl.ds(q_start, tq), :]                                  # (tq, C) bf16
    q = jnp.dot(xq, wq_ref[...], preferred_element_type=jnp.float32) + bq_ref[...]
    q_ref[...] = q.astype(jnp.bfloat16)

    # --- Per-head attention.  PV lands in static column slices of pv_ref;
    #     the output projection is one contraction=C matmul afterwards. ------
    for h in range(head):                 # static unroll: lane offsets stay static
        ksl = slice(h * c_h, (h + 1) * c_h)
        vsl = slice(c + h * c_h, c + (h + 1) * c_h)
        qh = q_ref[:, ksl]                                             # (tq, c_h) bf16
        kh = kv_ref[:, ksl]                                            # (N, c_h)  bf16
        vh = kv_ref[:, vsl]                                            # (N, c_h)  bf16
        # scores = qh @ kh^T (no transpose materialized), f32 accumulation.
        s = lax.dot_general(qh, kh, (((1,), (1,)), ((), ())),
                            preferred_element_type=jnp.float32)        # (tq, N) f32
        if n_pad != n_real:                                            # static guard
            col = lax.broadcasted_iota(jnp.int32, s.shape, 1)
            s = jnp.where(col < n_real, s, jnp.float32(-1e9))
        # Numerically-stable softmax with DEFERRED normalisation.
        m = jnp.max(s, axis=-1, keepdims=True)
        e = jnp.exp(s - m)                                             # f32, unnormalised
        inv = pl.reciprocal(jnp.sum(e, axis=-1, keepdims=True), approx=True)
        pv = jnp.dot(e.astype(jnp.bfloat16), vh,
                     preferred_element_type=jnp.float32)               # (tq, c_h) f32
        pv_ref[:, ksl] = (pv * inv).astype(jnp.bfloat16)               # scale small result

    out = jnp.dot(pv_ref[...], wo_ref[...],
                  preferred_element_type=jnp.float32) + bo_ref[...]
    o_ref[...] = out.astype(o_ref.dtype)


def multi_headed_attention(x, params, head):
    """x: (B, N, C) float32. params: dict of PyTorch-style Linear weights."""
    b, n, c = x.shape
    assert c % head == 0
    c_h = c // head
    scale = 1.0 / math.sqrt(c_h)

    # Fold the attention scale into the Q projection, fuse K/V weights, and
    # pre-transpose everything to (in, out) so the kernel never transposes.
    wq_t = (params["wq"] * scale).T                                    # (C, C)
    bq = (params["bq"] * scale).reshape(1, c)                          # (1, C) f32
    wkv_t = jnp.concatenate([params["wk"], params["wv"]], axis=0).T    # (C, 2C)
    bkv = jnp.concatenate([params["bk"], params["bv"]], axis=0).reshape(1, 2 * c)
    wo_t = params["wo"].T                                              # (C, C)
    bo = params["bo"].reshape(1, c)                                    # (1, C) f32

    # bf16 MXU operands; accumulation stays f32 inside the kernel.
    x_bf = x.astype(jnp.bfloat16)
    wq_t = wq_t.astype(jnp.bfloat16)
    wkv_t = wkv_t.astype(jnp.bfloat16)
    wo_t = wo_t.astype(jnp.bfloat16)

    # Query-tile size: whole sequence when small, else 256 rows (fills the
    # 256-row MXU on v6e/v7x; 128 would also suffice on v5e).  Never fall back
    # to tq == n for large N: pad and mask instead.
    if n <= 256:
        tq = n
        n_pad = n
    else:
        tq = 256
        n_pad = ((n + tq - 1) // tq) * tq
    if n_pad != n:
        x_bf = jnp.pad(x_bf, ((0, 0), (0, n_pad - n), (0, 0)))
    grid = (b, n_pad // tq)
    kv_chunk = tq                     # bounds the f32 K/V projection temporary

    # VMEM budget: single-buffered weights + pipelined x/out blocks +
    # persistent scratches + in-flight f32 temporaries, with headroom, capped
    # at this chip's physical VMEM (128 MiB v5e/v6e, 64 MiB v7x).
    bf16, f32 = 2, 4
    out_bytes = jnp.dtype(x.dtype).itemsize
    work = ((c * c + c * 2 * c + c * c) * bf16 + (c + 2 * c + c) * f32   # weights/biases
            + 2 * n_pad * c * bf16                                       # x block (dbl buf)
            + 2 * tq * c * out_bytes                                     # out block (dbl buf)
            + n_pad * 2 * c * bf16 + 2 * tq * c * bf16                   # kv / q / pv scratch
            + 3 * tq * n_pad * f32                                       # score/exp temps
            + kv_chunk * 2 * c * f32 + 2 * tq * c * f32)                 # projection temps
    try:
        phys_vmem = int(pltpu.get_tpu_info().vmem_capacity_bytes)
    except Exception:
        phys_vmem = 64 * 1024 * 1024
    vmem_limit = int(min(max(2 * work, 32 * 1024 * 1024), phys_vmem))

    x_spec = pl.BlockSpec((pl.Squeezed(), n_pad, c), lambda i, j: (i, 0, 0))
    out_spec = pl.BlockSpec((pl.Squeezed(), tq, c), lambda i, j: (i, j, 0))

    def _attention_call(single_buffer_weights):
        def wspec(shape):
            idx = lambda i, j: (0,) * len(shape)
            if single_buffer_weights:
                # Constant-index blocks: double-buffering only duplicates the
                # weights in VMEM with no pipelining benefit.
                return pl.BlockSpec(shape, idx, pipeline_mode=pl.Buffered(1))
            return pl.BlockSpec(shape, idx)

        return pl.pallas_call(
            partial(_mha_kernel, head=head, tq=tq, kv_chunk=kv_chunk, n_real=n),
            out_shape=jax.ShapeDtypeStruct((b, n_pad, c), x.dtype),
            grid_spec=pltpu.PrefetchScalarGridSpec(
                num_scalar_prefetch=0,
                grid=grid,
                in_specs=[
                    x_spec,                       # x (full padded sequence, bf16)
                    wspec((c, c)),                # Wq^T  (bf16, scale folded)
                    wspec((1, c)),                # bq    (f32, scale folded)
                    wspec((c, 2 * c)),            # Wkv^T (bf16)
                    wspec((1, 2 * c)),            # bkv   (f32)
                    wspec((c, c)),                # Wo^T  (bf16)
                    wspec((1, c)),                # bo    (f32)
                ],
                out_specs=out_spec,
                scratch_shapes=[
                    pltpu.VMEM((n_pad, 2 * c), jnp.bfloat16),   # [K | V] for the sequence
                    pltpu.VMEM((tq, c), jnp.bfloat16),          # Q tile
                    pltpu.VMEM((tq, c), jnp.bfloat16),          # per-head PV concat
                ],
            ),
            compiler_params=pltpu.CompilerParams(
                dimension_semantics=("parallel", "arbitrary"),
                vmem_limit_bytes=vmem_limit),
        )(x_bf, wq_t, bq, wkv_t, bkv, wo_t, bo)

    try:
        out = _attention_call(True)
    except Exception:
        # pl.Buffered(1) is a pure VMEM saving; fall back to default
        # double-buffered weight blocks if this JAX build rejects it.
        out = _attention_call(False)

    if n_pad != n:
        out = out[:, :n, :]
    return out


def _reference(x, params, head):
    """Pure-JAX f32 reference mirroring the PyTorch forward (eval mode)."""
    b, n, c = x.shape
    c_h = c // head

    def lin(x, w, bias):
        return x @ w.T + bias

    q = lin(x, params["wq"], params["bq"]).reshape(b, n, head, c_h).transpose(0, 2, 1, 3)
    k = lin(x, params["wk"], params["bk"]).reshape(b, n, head, c_h).transpose(0, 2, 1, 3)
    v = lin(x, params["wv"], params["bv"]).reshape(b, n, head, c_h).transpose(0, 2, 1, 3)

    scores = jnp.einsum("bhqd,bhkd->bhqk", q, k) / math.sqrt(c_h)
    p = jax.nn.softmax(scores, axis=-1)
    att = jnp.einsum("bhqk,bhkd->bhqd", p, v)
    att = att.transpose(0, 2, 1, 3).reshape(b, n, c)
    return lin(att, params["wo"], params["bo"])


if __name__ == "__main__":
    # Small shapes consistent with the module: batch=2, seq=8, d_model=32, 4 heads.
    B, N, C, HEAD = 2, 8, 32, 4

    key = jax.random.PRNGKey(0)
    keys = jax.random.split(key, 9)
    x = jax.random.normal(keys[0], (B, N, C), dtype=jnp.float32)

    def init_linear(kw, kb, fan_in, fan_out):
        # Deterministic, PyTorch-like uniform(-1/sqrt(fan_in), 1/sqrt(fan_in)).
        bound = 1.0 / math.sqrt(fan_in)
        w = jax.random.uniform(kw, (fan_out, fan_in), jnp.float32, -bound, bound)
        b = jax.random.uniform(kb, (fan_out,), jnp.float32, -bound, bound)
        return w, b

    wq, bq = init_linear(keys[1], keys[2], C, C)
    wk, bk = init_linear(keys[3], keys[4], C, C)
    wv, bv = init_linear(keys[5], keys[6], C, C)
    wo, bo = init_linear(keys[7], keys[8], C, C)
    params = dict(wq=wq, bq=bq, wk=wk, bk=bk, wv=wv, bv=bv, wo=wo, bo=bo)

    out = multi_headed_attention(x, params, HEAD)
    out = jax.block_until_ready(out)

    ref = _reference(x, params, HEAD)
    assert out.shape == (B, N, C)
    # Tolerance accounts for bf16 MXU operands + approx reciprocal (f32 ref is exact-path).
    assert jnp.allclose(out, ref, atol=3e-2, rtol=3e-2), "mismatch vs reference"

    print("KERNEL_OK")
</pallas_src>

<mosaic_0001>
module attributes {stable_mosaic.version = 11 : i64} {
  func.func @_mha_kernel(%arg0: i32, %arg1: i32, %arg2: memref<1x8x32xbf16, #tpu.memory_space<vmem>>, %arg3: memref<32x32xbf16, #tpu.memory_space<vmem>>, %arg4: memref<1x32xf32, #tpu.memory_space<vmem>>, %arg5: memref<32x64xbf16, #tpu.memory_space<vmem>>, %arg6: memref<1x64xf32, #tpu.memory_space<vmem>>, %arg7: memref<32x32xbf16, #tpu.memory_space<vmem>>, %arg8: memref<1x32xf32, #tpu.memory_space<vmem>>, %arg9: memref<1x8x32xf32, #tpu.memory_space<vmem>>, %arg10: memref<8x64xbf16, #tpu.memory_space<vmem>>, %arg11: memref<8x32xbf16, #tpu.memory_space<vmem>>, %arg12: memref<8x32xbf16, #tpu.memory_space<vmem>>) attributes {dimension_semantics = [#tpu.dimension_semantics<parallel>, #tpu.dimension_semantics<arbitrary>], iteration_bounds = array<i64: 2, 1>, scalar_prefetch = 0 : i64, scratch_operands = 3 : i64, tpu.core_type = #tpu.core_type<tc>, window_params = [{transform_indices = @transform_0, window_bounds = array<i64: 1, 8, 32>}, {pipeline_mode = #tpu.pipeline_mode<synchronous>, transform_indices = @transform_1, window_bounds = array<i64: 32, 32>}, {pipeline_mode = #tpu.pipeline_mode<synchronous>, transform_indices = @transform_2, window_bounds = array<i64: 1, 32>}, {pipeline_mode = #tpu.pipeline_mode<synchronous>, transform_indices = @transform_3, window_bounds = array<i64: 32, 64>}, {pipeline_mode = #tpu.pipeline_mode<synchronous>, transform_indices = @transform_4, window_bounds = array<i64: 1, 64>}, {pipeline_mode = #tpu.pipeline_mode<synchronous>, transform_indices = @transform_5, window_bounds = array<i64: 32, 32>}, {pipeline_mode = #tpu.pipeline_mode<synchronous>, transform_indices = @transform_6, window_bounds = array<i64: 1, 32>}, {transform_indices = @transform_7, window_bounds = array<i64: 1, 8, 32>}]} {
    %c0_i32 = arith.constant 0 : i32
    %0 = arith.cmpi eq, %arg1, %c0_i32 : i32
    %1 = arith.extui %0 : i1 to i32
    %c0_i32_0 = arith.constant 0 : i32
    %2 = arith.cmpi ne, %1, %c0_i32_0 : i32
    scf.if %2 {
      %c0_i32_59 = arith.constant 0 : i32
      %c8_i32_60 = arith.constant 8 : i32
      %96 = arith.muli %c0_i32_59, %c8_i32_60 : i32
      %97 = tpu.assume_multiple %96, 8 : i32
      %c0_61 = arith.constant 0 : index
      %98 = arith.index_cast %97 : i32 to index
      %c0_62 = arith.constant 0 : index
      %99 = vector.load %arg2[%c0_61, %98, %c0_62] : memref<1x8x32xbf16, #tpu.memory_space<vmem>>, vector<1x8x32xbf16>
      %100 = vector.shape_cast %99 : vector<1x8x32xbf16> to vector<8x32xbf16>
      %c0_63 = arith.constant 0 : index
      %c0_64 = arith.constant 0 : index
      %101 = vector.load %arg5[%c0_63, %c0_64] : memref<32x64xbf16, #tpu.memory_space<vmem>>, vector<32x64xbf16>
      %cst_65 = arith.constant dense<0.000000e+00> : vector<8x64xf32>
      %102 = tpu.matmul %100, %101, %cst_65 {dimension_numbers = #tpu.dot_dimension_numbers<[1], [0], [0], [1], [0, 0, 1, 1], [], []>} : vector<8x32xbf16>, vector<32x64xbf16>, vector<8x64xf32> -> vector<8x64xf32>
      %c0_66 = arith.constant 0 : index
      %c0_67 = arith.constant 0 : index
      %103 = vector.load %arg6[%c0_66, %c0_67] : memref<1x64xf32, #tpu.memory_space<vmem>>, vector<1x64xf32>
      %104 = vector.broadcast %103 : vector<1x64xf32> to vector<8x64xf32>
      %105 = arith.addf %102, %104 : vector<8x64xf32>
      %106 = arith.truncf %105 : vector<8x64xf32> to vector<8x64xbf16>
      %107 = arith.index_cast %97 : i32 to index
      %c0_68 = arith.constant 0 : index
      %108 = vector.load %arg10[%107, %c0_68] : memref<8x64xbf16, #tpu.memory_space<vmem>>, vector<8x64xbf16>
      tpu.vector_store %arg10[%107, %c0_68], %106 {strides = array<i32>} : memref<8x64xbf16, #tpu.memory_space<vmem>>, vector<8x64xbf16>,
      %c1_i32 = arith.constant 1 : i32
    } else {
    }
    %c8_i32 = arith.constant 8 : i32
    %3 = arith.muli %arg1, %c8_i32 : i32
    %4 = tpu.assume_multiple %3, 8 : i32
    %c0 = arith.constant 0 : index
    %5 = arith.index_cast %4 : i32 to index
    %c0_1 = arith.constant 0 : index
    %6 = vector.load %arg2[%c0, %5, %c0_1] : memref<1x8x32xbf16, #tpu.memory_space<vmem>>, vector<1x8x32xbf16>
    %7 = vector.shape_cast %6 : vector<1x8x32xbf16> to vector<8x32xbf16>
    %c0_2 = arith.constant 0 : index
    %c0_3 = arith.constant 0 : index
    %8 = vector.load %arg3[%c0_2, %c0_3] : memref<32x32xbf16, #tpu.memory_space<vmem>>, vector<32x32xbf16>
    %cst = arith.constant dense<0.000000e+00> : vector<8x32xf32>
    %9 = tpu.matmul %7, %8, %cst {dimension_numbers = #tpu.dot_dimension_numbers<[1], [0], [0], [1], [0, 0, 1, 1], [], []>} : vector<8x32xbf16>, vector<32x32xbf16>, vector<8x32xf32> -> vector<8x32xf32>
    %c0_4 = arith.constant 0 : index
    %c0_5 = arith.constant 0 : index
    %10 = vector.load %arg4[%c0_4, %c0_5] : memref<1x32xf32, #tpu.memory_space<vmem>>, vector<1x32xf32>
    %11 = vector.broadcast %10 : vector<1x32xf32> to vector<8x32xf32>
    %12 = arith.addf %9, %11 : vector<8x32xf32>
    %13 = arith.truncf %12 : vector<8x32xf32> to vector<8x32xbf16>
    %c0_6 = arith.constant 0 : index
    %c0_7 = arith.constant 0 : index
    %14 = vector.load %arg11[%c0_6, %c0_7] : memref<8x32xbf16, #tpu.memory_space<vmem>>, vector<8x32xbf16>
    tpu.vector_store %arg11[%c0_6, %c0_7], %13 {strides = array<i32>} : memref<8x32xbf16, #tpu.memory_space<vmem>>, vector<8x32xbf16>,
    %c0_8 = arith.constant 0 : index
    %c0_9 = arith.constant 0 : index
    %15 = vector.load %arg11[%c0_8, %c0_9] : memref<8x32xbf16, #tpu.memory_space<vmem>>, vector<8x8xbf16>
    %c0_10 = arith.constant 0 : index
    %c0_11 = arith.constant 0 : index
    %16 = vector.load %arg10[%c0_10, %c0_11] : memref<8x64xbf16, #tpu.memory_space<vmem>>, vector<8x8xbf16>
    %c0_12 = arith.constant 0 : index
    %c32 = arith.constant 32 : index
    %17 = vector.load %arg10[%c0_12, %c32] : memref<8x64xbf16, #tpu.memory_space<vmem>>, vector<8x8xbf16>
    %cst_13 = arith.constant dense<0.000000e+00> : vector<8x8xf32>
    %18 = tpu.matmul %15, %16, %cst_13 {dimension_numbers = #tpu.dot_dimension_numbers<[1], [1], [0], [0], [0, 0, 1, 0], [], []>} : vector<8x8xbf16>, vector<8x8xbf16>, vector<8x8xf32> -> vector<8x8xf32>
    %cst_14 = arith.constant dense<0xFF800000> : vector<8xf32>
    %19 = vector.multi_reduction <maximumf>, %18, %cst_14 [1] : vector<8x8xf32> to vector<8xf32>
    %20 = vector.shape_cast %19 : vector<8xf32> to vector<8x1xf32>
    %21 = vector.broadcast %20 : vector<8x1xf32> to vector<8x8xf32>
    %22 = arith.subf %18, %21 : vector<8x8xf32>
    %23 = math.exp %22 : vector<8x8xf32>
    %cst_15 = arith.constant dense<0.000000e+00> : vector<8xf32>
    %24 = vector.multi_reduction <add>, %23, %cst_15 [1] : vector<8x8xf32> to vector<8xf32>
    %25 = vector.shape_cast %24 : vector<8xf32> to vector<8x1xf32>
    %26 = tpu.reciprocal %25 {approx = true} : vector<8x1xf32> -> vector<8x1xf32>
    %27 = arith.truncf %23 : vector<8x8xf32> to vector<8x8xbf16>
    %cst_16 = arith.constant dense<0.000000e+00> : vector<8x8xf32>
    %28 = tpu.matmul %27, %17, %cst_16 {dimension_numbers = #tpu.dot_dimension_numbers<[1], [0], [0], [1], [0, 0, 1, 1], [], []>} : vector<8x8xbf16>, vector<8x8xbf16>, vector<8x8xf32> -> vector<8x8xf32>
    %29 = vector.broadcast %26 : vector<8x1xf32> to vector<8x8xf32>
    %30 = arith.mulf %28, %29 : vector<8x8xf32>
    %31 = arith.truncf %30 : vector<8x8xf32> to vector<8x8xbf16>
    %c0_17 = arith.constant 0 : index
    %c0_18 = arith.constant 0 : index
    %32 = vector.load %arg12[%c0_17, %c0_18] : memref<8x32xbf16, #tpu.memory_space<vmem>>, vector<8x8xbf16>
    tpu.vector_store %arg12[%c0_17, %c0_18], %31 {strides = array<i32>} : memref<8x32xbf16, #tpu.memory_space<vmem>>, vector<8x8xbf16>,
    %c0_19 = arith.constant 0 : index
    %c8 = arith.constant 8 : index
    %33 = vector.load %arg11[%c0_19, %c8] : memref<8x32xbf16, #tpu.memory_space<vmem>>, vector<8x8xbf16>
    %c0_20 = arith.constant 0 : index
    %c8_21 = arith.constant 8 : index
    %34 = vector.load %arg10[%c0_20, %c8_21] : memref<8x64xbf16, #tpu.memory_space<vmem>>, vector<8x8xbf16>
    %c0_22 = arith.constant 0 : index
    %c40 = arith.constant 40 : index
    %35 = vector.load %arg10[%c0_22, %c40] : memref<8x64xbf16, #tpu.memory_space<vmem>>, vector<8x8xbf16>
    %cst_23 = arith.constant dense<0.000000e+00> : vector<8x8xf32>
    %36 = tpu.matmul %33, %34, %cst_23 {dimension_numbers = #tpu.dot_dimension_numbers<[1], [1], [0], [0], [0, 0, 1, 0], [], []>} : vector<8x8xbf16>, vector<8x8xbf16>, vector<8x8xf32> -> vector<8x8xf32>
    %cst_24 = arith.constant dense<0xFF800000> : vector<8xf32>
    %37 = vector.multi_reduction <maximumf>, %36, %cst_24 [1] : vector<8x8xf32> to vector<8xf32>
    %38 = vector.shape_cast %37 : vector<8xf32> to vector<8x1xf32>
    %39 = vector.broadcast %38 : vector<8x1xf32> to vector<8x8xf32>
    %40 = arith.subf %36, %39 : vector<8x8xf32>
    %41 = math.exp %40 : vector<8x8xf32>
    %cst_25 = arith.constant dense<0.000000e+00> : vector<8xf32>
    %42 = vector.multi_reduction <add>, %41, %cst_25 [1] : vector<8x8xf32> to vector<8xf32>
    %43 = vector.shape_cast %42 : vector<8xf32> to vector<8x1xf32>
    %44 = tpu.reciprocal %43 {approx = true} : vector<8x1xf32> -> vector<8x1xf32>
    %45 = arith.truncf %41 : vector<8x8xf32> to vector<8x8xbf16>
    %cst_26 = arith.constant dense<0.000000e+00> : vector<8x8xf32>
    %46 = tpu.matmul %45, %35, %cst_26 {dimension_numbers = #tpu.dot_dimension_numbers<[1], [0], [0], [1], [0, 0, 1, 1], [], []>} : vector<8x8xbf16>, vector<8x8xbf16>, vector<8x8xf32> -> vector<8x8xf32>
    %47 = vector.broadcast %44 : vector<8x1xf32> to vector<8x8xf32>
    %48 = arith.mulf %46, %47 : vector<8x8xf32>
    %49 = arith.truncf %48 : vector<8x8xf32> to vector<8x8xbf16>
    %c0_27 = arith.constant 0 : index
    %c8_28 = arith.constant 8 : index
    %50 = vector.load %arg12[%c0_27, %c8_28] : memref<8x32xbf16, #tpu.memory_space<vmem>>, vector<8x8xbf16>
    tpu.vector_store %arg12[%c0_27, %c8_28], %49 {strides = array<i32>} : memref<8x32xbf16, #tpu.memory_space<vmem>>, vector<8x8xbf16>,
    %c0_29 = arith.constant 0 : index
    %c16 = arith.constant 16 : index
    %51 = vector.load %arg11[%c0_29, %c16] : memref<8x32xbf16, #tpu.memory_space<vmem>>, vector<8x8xbf16>
    %c0_30 = arith.constant 0 : index
    %c16_31 = arith.constant 16 : index
    %52 = vector.load %arg10[%c0_30, %c16_31] : memref<8x64xbf16, #tpu.memory_space<vmem>>, vector<8x8xbf16>
    %c0_32 = arith.constant 0 : index
    %c48 = arith.constant 48 : index
    %53 = vector.load %arg10[%c0_32, %c48] : memref<8x64xbf16, #tpu.memory_space<vmem>>, vector<8x8xbf16>
    %cst_33 = arith.constant dense<0.000000e+00> : vector<8x8xf32>
    %54 = tpu.matmul %51, %52, %cst_33 {dimension_numbers = #tpu.dot_dimension_numbers<[1], [1], [0], [0], [0, 0, 1, 0], [], []>} : vector<8x8xbf16>, vector<8x8xbf16>, vector<8x8xf32> -> vector<8x8xf32>
    %cst_34 = arith.constant dense<0xFF800000> : vector<8xf32>
    %55 = vector.multi_reduction <maximumf>, %54, %cst_34 [1] : vector<8x8xf32> to vector<8xf32>
    %56 = vector.shape_cast %55 : vector<8xf32> to vector<8x1xf32>
    %57 = vector.broadcast %56 : vector<8x1xf32> to vector<8x8xf32>
    %58 = arith.subf %54, %57 : vector<8x8xf32>
    %59 = math.exp %58 : vector<8x8xf32>
    %cst_35 = arith.constant dense<0.000000e+00> : vector<8xf32>
    %60 = vector.multi_reduction <add>, %59, %cst_35 [1] : vector<8x8xf32> to vector<8xf32>
    %61 = vector.shape_cast %60 : vector<8xf32> to vector<8x1xf32>
    %62 = tpu.reciprocal %61 {approx = true} : vector<8x1xf32> -> vector<8x1xf32>
    %63 = arith.truncf %59 : vector<8x8xf32> to vector<8x8xbf16>
    %cst_36 = arith.constant dense<0.000000e+00> : vector<8x8xf32>
    %64 = tpu.matmul %63, %53, %cst_36 {dimension_numbers = #tpu.dot_dimension_numbers<[1], [0], [0], [1], [0, 0, 1, 1], [], []>} : vector<8x8xbf16>, vector<8x8xbf16>, vector<8x8xf32> -> vector<8x8xf32>
    %65 = vector.broadcast %62 : vector<8x1xf32> to vector<8x8xf32>
    %66 = arith.mulf %64, %65 : vector<8x8xf32>
    %67 = arith.truncf %66 : vector<8x8xf32> to vector<8x8xbf16>
    %c0_37 = arith.constant 0 : index
    %c16_38 = arith.constant 16 : index
    %68 = vector.load %arg12[%c0_37, %c16_38] : memref<8x32xbf16, #tpu.memory_space<vmem>>, vector<8x8xbf16>
    tpu.vector_store %arg12[%c0_37, %c16_38], %67 {strides = array<i32>} : memref<8x32xbf16, #tpu.memory_space<vmem>>, vector<8x8xbf16>,
    %c0_39 = arith.constant 0 : index
    %c24 = arith.constant 24 : index
    %69 = vector.load %arg11[%c0_39, %c24] : memref<8x32xbf16, #tpu.memory_space<vmem>>, vector<8x8xbf16>
    %c0_40 = arith.constant 0 : index
    %c24_41 = arith.constant 24 : index
    %70 = vector.load %arg10[%c0_40, %c24_41] : memref<8x64xbf16, #tpu.memory_space<vmem>>, vector<8x8xbf16>
    %c0_42 = arith.constant 0 : index
    %c56 = arith.constant 56 : index
    %71 = vector.load %arg10[%c0_42, %c56] : memref<8x64xbf16, #tpu.memory_space<vmem>>, vector<8x8xbf16>
    %cst_43 = arith.constant dense<0.000000e+00> : vector<8x8xf32>
    %72 = tpu.matmul %69, %70, %cst_43 {dimension_numbers = #tpu.dot_dimension_numbers<[1], [1], [0], [0], [0, 0, 1, 0], [], []>} : vector<8x8xbf16>, vector<8x8xbf16>, vector<8x8xf32> -> vector<8x8xf32>
    %cst_44 = arith.constant dense<0xFF800000> : vector<8xf32>
    %73 = vector.multi_reduction <maximumf>, %72, %cst_44 [1] : vector<8x8xf32> to vector<8xf32>
    %74 = vector.shape_cast %73 : vector<8xf32> to vector<8x1xf32>
    %75 = vector.broadcast %74 : vector<8x1xf32> to vector<8x8xf32>
    %76 = arith.subf %72, %75 : vector<8x8xf32>
    %77 = math.exp %76 : vector<8x8xf32>
    %cst_45 = arith.constant dense<0.000000e+00> : vector<8xf32>
    %78 = vector.multi_reduction <add>, %77, %cst_45 [1] : vector<8x8xf32> to vector<8xf32>
    %79 = vector.shape_cast %78 : vector<8xf32> to vector<8x1xf32>
    %80 = tpu.reciprocal %79 {approx = true} : vector<8x1xf32> -> vector<8x1xf32>
    %81 = arith.truncf %77 : vector<8x8xf32> to vector<8x8xbf16>
    %cst_46 = arith.constant dense<0.000000e+00> : vector<8x8xf32>
    %82 = tpu.matmul %81, %71, %cst_46 {dimension_numbers = #tpu.dot_dimension_numbers<[1], [0], [0], [1], [0, 0, 1, 1], [], []>} : vector<8x8xbf16>, vector<8x8xbf16>, vector<8x8xf32> -> vector<8x8xf32>
    %83 = vector.broadcast %80 : vector<8x1xf32> to vector<8x8xf32>
    %84 = arith.mulf %82, %83 : vector<8x8xf32>
    %85 = arith.truncf %84 : vector<8x8xf32> to vector<8x8xbf16>
    %c0_47 = arith.constant 0 : index
    %c24_48 = arith.constant 24 : index
    %86 = vector.load %arg12[%c0_47, %c24_48] : memref<8x32xbf16, #tpu.memory_space<vmem>>, vector<8x8xbf16>
    tpu.vector_store %arg12[%c0_47, %c24_48], %85 {strides = array<i32>} : memref<8x32xbf16, #tpu.memory_space<vmem>>, vector<8x8xbf16>,
    %c0_49 = arith.constant 0 : index
    %c0_50 = arith.constant 0 : index
    %87 = vector.load %arg12[%c0_49, %c0_50] : memref<8x32xbf16, #tpu.memory_space<vmem>>, vector<8x32xbf16>
    %c0_51 = arith.constant 0 : index
    %c0_52 = arith.constant 0 : index
    %88 = vector.load %arg7[%c0_51, %c0_52] : memref<32x32xbf16, #tpu.memory_space<vmem>>, vector<32x32xbf16>
    %cst_53 = arith.constant dense<0.000000e+00> : vector<8x32xf32>
    %89 = tpu.matmul %87, %88, %cst_53 {dimension_numbers = #tpu.dot_dimension_numbers<[1], [0], [0], [1], [0, 0, 1, 1], [], []>} : vector<8x32xbf16>, vector<32x32xbf16>, vector<8x32xf32> -> vector<8x32xf32>
    %c0_54 = arith.constant 0 : index
    %c0_55 = arith.constant 0 : index
    %90 = vector.load %arg8[%c0_54, %c0_55] : memref<1x32xf32, #tpu.memory_space<vmem>>, vector<1x32xf32>
    %91 = vector.broadcast %90 : vector<1x32xf32> to vector<8x32xf32>
    %92 = arith.addf %89, %91 : vector<8x32xf32>
    %c0_56 = arith.constant 0 : index
    %c0_57 = arith.constant 0 : index
    %c0_58 = arith.constant 0 : index
    %93 = vector.load %arg9[%c0_56, %c0_57, %c0_58] : memref<1x8x32xf32, #tpu.memory_space<vmem>>, vector<1x8x32xf32>
    %94 = vector.shape_cast %93 : vector<1x8x32xf32> to vector<8x32xf32>
    %95 = vector.shape_cast %92 : vector<8x32xf32> to vector<1x8x32xf32>
    tpu.vector_store %arg9[%c0_56, %c0_57, %c0_58], %95 {strides = array<i32>} : memref<1x8x32xf32, #tpu.memory_space<vmem>>, vector<1x8x32xf32>,
    return
  }
  func.func @transform_0(%arg0: i32, %arg1: i32) -> (i32, i32, i32) {
    %c0_i32 = arith.constant 0 : i32
    %c0_i32_0 = arith.constant 0 : i32
    %c0_i32_1 = arith.constant 0 : i32
    return %arg0, %c0_i32, %c0_i32_0 : i32, i32, i32
  }
  func.func @transform_1(%arg0: i32, %arg1: i32) -> (i32, i32) {
    %c0_i32 = arith.constant 0 : i32
    %c0_i32_0 = arith.constant 0 : i32
    %c0_i32_1 = arith.constant 0 : i32
    return %c0_i32, %c0_i32_0 : i32, i32
  }
  func.func @transform_2(%arg0: i32, %arg1: i32) -> (i32, i32) {
    %c0_i32 = arith.constant 0 : i32
    %c0_i32_0 = arith.constant 0 : i32
    %c0_i32_1 = arith.constant 0 : i32
    return %c0_i32, %c0_i32_0 : i32, i32
  }
  func.func @transform_3(%arg0: i32, %arg1: i32) -> (i32, i32) {
    %c0_i32 = arith.constant 0 : i32
    %c0_i32_0 = arith.constant 0 : i32
    %c0_i32_1 = arith.constant 0 : i32
    return %c0_i32, %c0_i32_0 : i32, i32
  }
  func.func @transform_4(%arg0: i32, %arg1: i32) -> (i32, i32) {
    %c0_i32 = arith.constant 0 : i32
    %c0_i32_0 = arith.constant 0 : i32
    %c0_i32_1 = arith.constant 0 : i32
    return %c0_i32, %c0_i32_0 : i32, i32
  }
  func.func @transform_5(%arg0: i32, %arg1: i32) -> (i32, i32) {
    %c0_i32 = arith.constant 0 : i32
    %c0_i32_0 = arith.constant 0 : i32
    %c0_i32_1 = arith.constant 0 : i32
    return %c0_i32, %c0_i32_0 : i32, i32
  }
  func.func @transform_6(%arg0: i32, %arg1: i32) -> (i32, i32) {
    %c0_i32 = arith.constant 0 : i32
    %c0_i32_0 = arith.constant 0 : i32
    %c0_i32_1 = arith.constant 0 : i32
    return %c0_i32, %c0_i32_0 : i32, i32
  }
  func.func @transform_7(%arg0: i32, %arg1: i32) -> (i32, i32, i32) {
    %c0_i32 = arith.constant 0 : i32
    %c0_i32_0 = arith.constant 0 : i32
    return %arg0, %arg1, %c0_i32 : i32, i32, i32
  }
}

module attributes {stable_mosaic.version = 11 : i64} {
  func.func @_mha_kernel(%arg0: i32, %arg1: i32, %arg2: memref<1x8x32xbf16, #tpu.memory_space<vmem>>, %arg3: memref<32x32xbf16, #tpu.memory_space<vmem>>, %arg4: memref<1x32xf32, #tpu.memory_space<vmem>>, %arg5: memref<32x64xbf16, #tpu.memory_space<vmem>>, %arg6: memref<1x64xf32, #tpu.memory_space<vmem>>, %arg7: memref<32x32xbf16, #tpu.memory_space<vmem>>, %arg8: memref<1x32xf32, #tpu.memory_space<vmem>>, %arg9: memref<1x8x32xf32, #tpu.memory_space<vmem>>, %arg10: memref<8x64xbf16, #tpu.memory_space<vmem>>, %arg11: memref<8x32xbf16, #tpu.memory_space<vmem>>, %arg12: memref<8x32xbf16, #tpu.memory_space<vmem>>) attributes {dimension_semantics = [#tpu.dimension_semantics<parallel>, #tpu.dimension_semantics<arbitrary>], iteration_bounds = array<i64: 2, 1>, scalar_prefetch = 0 : i64, scratch_operands = 3 : i64, tpu.core_type = #tpu.core_type<tc>, window_params = [{transform_indices = @transform_0, window_bounds = array<i64: 1, 8, 32>}, {pipeline_mode = #tpu.pipeline_mode<synchronous>, transform_indices = @transform_1, window_bounds = array<i64: 32, 32>}, {pipeline_mode = #tpu.pipeline_mode<synchronous>, transform_indices = @transform_2, window_bounds = array<i64: 1, 32>}, {pipeline_mode = #tpu.pipeline_mode<synchronous>, transform_indices = @transform_3, window_bounds = array<i64: 32, 64>}, {pipeline_mode = #tpu.pipeline_mode<synchronous>, transform_indices = @transform_4, window_bounds = array<i64: 1, 64>}, {pipeline_mode = #tpu.pipeline_mode<synchronous>, transform_indices = @transform_5, window_bounds = array<i64: 32, 32>}, {pipeline_mode = #tpu.pipeline_mode<synchronous>, transform_indices = @transform_6, window_bounds = array<i64: 1, 32>}, {transform_indices = @transform_7, window_bounds = array<i64: 1, 8, 32>}]} {
    %c0_i32 = arith.constant 0 : i32
    %0 = arith.cmpi eq, %arg1, %c0_i32 : i32
    %1 = arith.extui %0 : i1 to i32
    %c0_i32_0 = arith.constant 0 : i32
    %2 = arith.cmpi ne, %1, %c0_i32_0 : i32
    scf.if %2 {
      %c0_i32_59 = arith.constant 0 : i32
      %c8_i32_60 = arith.constant 8 : i32
      %96 = arith.muli %c0_i32_59, %c8_i32_60 : i32
      %97 = tpu.assume_multiple %96, 8 : i32
      %c0_61 = arith.constant 0 : index
      %98 = arith.index_cast %97 : i32 to index
      %c0_62 = arith.constant 0 : index
      %99 = vector.load %arg2[%c0_61, %98, %c0_62] : memref<1x8x32xbf16, #tpu.memory_space<vmem>>, vector<1x8x32xbf16>
      %100 = vector.shape_cast %99 : vector<1x8x32xbf16> to vector<8x32xbf16>
      %c0_63 = arith.constant 0 : index
      %c0_64 = arith.constant 0 : index
      %101 = vector.load %arg5[%c0_63, %c0_64] : memref<32x64xbf16, #tpu.memory_space<vmem>>, vector<32x64xbf16>
      %cst_65 = arith.constant dense<0.000000e+00> : vector<8x64xf32>
      %102 = tpu.matmul %100, %101, %cst_65 {dimension_numbers = #tpu.dot_dimension_numbers<[1], [0], [0], [1], [0, 0, 1, 1], [], []>} : vector<8x32xbf16>, vector<32x64xbf16>, vector<8x64xf32> -> vector<8x64xf32>
      %c0_66 = arith.constant 0 : index
      %c0_67 = arith.constant 0 : index
      %103 = vector.load %arg6[%c0_66, %c0_67] : memref<1x64xf32, #tpu.memory_space<vmem>>, vector<1x64xf32>
      %104 = vector.broadcast %103 : vector<1x64xf32> to vector<8x64xf32>
      %105 = arith.addf %102, %104 : vector<8x64xf32>
      %106 = arith.truncf %105 : vector<8x64xf32> to vector<8x64xbf16>
      %107 = arith.index_cast %97 : i32 to index
      %c0_68 = arith.constant 0 : index
      %108 = vector.load %arg10[%107, %c0_68] : memref<8x64xbf16, #tpu.memory_space<vmem>>, vector<8x64xbf16>
      tpu.vector_store %arg10[%107, %c0_68], %106 {strides = array<i32>} : memref<8x64xbf16, #tpu.memory_space<vmem>>, vector<8x64xbf16>,
      %c1_i32 = arith.constant 1 : i32
    } else {
    }
    %c8_i32 = arith.constant 8 : i32
    %3 = arith.muli %arg1, %c8_i32 : i32
    %4 = tpu.assume_multiple %3, 8 : i32
    %c0 = arith.constant 0 : index
    %5 = arith.index_cast %4 : i32 to index
    %c0_1 = arith.constant 0 : index
    %6 = vector.load %arg2[%c0, %5, %c0_1] : memref<1x8x32xbf16, #tpu.memory_space<vmem>>, vector<1x8x32xbf16>
    %7 = vector.shape_cast %6 : vector<1x8x32xbf16> to vector<8x32xbf16>
    %c0_2 = arith.constant 0 : index
    %c0_3 = arith.constant 0 : index
    %8 = vector.load %arg3[%c0_2, %c0_3] : memref<32x32xbf16, #tpu.memory_space<vmem>>, vector<32x32xbf16>
    %cst = arith.constant dense<0.000000e+00> : vector<8x32xf32>
    %9 = tpu.matmul %7, %8, %cst {dimension_numbers = #tpu.dot_dimension_numbers<[1], [0], [0], [1], [0, 0, 1, 1], [], []>} : vector<8x32xbf16>, vector<32x32xbf16>, vector<8x32xf32> -> vector<8x32xf32>
    %c0_4 = arith.constant 0 : index
    %c0_5 = arith.constant 0 : index
    %10 = vector.load %arg4[%c0_4, %c0_5] : memref<1x32xf32, #tpu.memory_space<vmem>>, vector<1x32xf32>
    %11 = vector.broadcast %10 : vector<1x32xf32> to vector<8x32xf32>
    %12 = arith.addf %9, %11 : vector<8x32xf32>
    %13 = arith.truncf %12 : vector<8x32xf32> to vector<8x32xbf16>
    %c0_6 = arith.constant 0 : index
    %c0_7 = arith.constant 0 : index
    %14 = vector.load %arg11[%c0_6, %c0_7] : memref<8x32xbf16, #tpu.memory_space<vmem>>, vector<8x32xbf16>
    tpu.vector_store %arg11[%c0_6, %c0_7], %13 {strides = array<i32>} : memref<8x32xbf16, #tpu.memory_space<vmem>>, vector<8x32xbf16>,
    %c0_8 = arith.constant 0 : index
    %c0_9 = arith.constant 0 : index
    %15 = vector.load %arg11[%c0_8, %c0_9] : memref<8x32xbf16, #tpu.memory_space<vmem>>, vector<8x8xbf16>
    %c0_10 = arith.constant 0 : index
    %c0_11 = arith.constant 0 : index
    %16 = vector.load %arg10[%c0_10, %c0_11] : memref<8x64xbf16, #tpu.memory_space<vmem>>, vector<8x8xbf16>
    %c0_12 = arith.constant 0 : index
    %c32 = arith.constant 32 : index
    %17 = vector.load %arg10[%c0_12, %c32] : memref<8x64xbf16, #tpu.memory_space<vmem>>, vector<8x8xbf16>
    %cst_13 = arith.constant dense<0.000000e+00> : vector<8x8xf32>
    %18 = tpu.matmul %15, %16, %cst_13 {dimension_numbers = #tpu.dot_dimension_numbers<[1], [1], [0], [0], [0, 0, 1, 0], [], []>} : vector<8x8xbf16>, vector<8x8xbf16>, vector<8x8xf32> -> vector<8x8xf32>
    %cst_14 = arith.constant dense<0xFF800000> : vector<8xf32>
    %19 = vector.multi_reduction <maximumf>, %18, %cst_14 [1] : vector<8x8xf32> to vector<8xf32>
    %20 = vector.shape_cast %19 : vector<8xf32> to vector<8x1xf32>
    %21 = vector.broadcast %20 : vector<8x1xf32> to vector<8x8xf32>
    %22 = arith.subf %18, %21 : vector<8x8xf32>
    %23 = math.exp %22 : vector<8x8xf32>
    %cst_15 = arith.constant dense<0.000000e+00> : vector<8xf32>
    %24 = vector.multi_reduction <add>, %23, %cst_15 [1] : vector<8x8xf32> to vector<8xf32>
    %25 = vector.shape_cast %24 : vector<8xf32> to vector<8x1xf32>
    %26 = tpu.reciprocal %25 {approx = true} : vector<8x1xf32> -> vector<8x1xf32>
    %27 = arith.truncf %23 : vector<8x8xf32> to vector<8x8xbf16>
    %cst_16 = arith.constant dense<0.000000e+00> : vector<8x8xf32>
    %28 = tpu.matmul %27, %17, %cst_16 {dimension_numbers = #tpu.dot_dimension_numbers<[1], [0], [0], [1], [0, 0, 1, 1], [], []>} : vector<8x8xbf16>, vector<8x8xbf16>, vector<8x8xf32> -> vector<8x8xf32>
    %29 = vector.broadcast %26 : vector<8x1xf32> to vector<8x8xf32>
    %30 = arith.mulf %28, %29 : vector<8x8xf32>
    %31 = arith.truncf %30 : vector<8x8xf32> to vector<8x8xbf16>
    %c0_17 = arith.constant 0 : index
    %c0_18 = arith.constant 0 : index
    %32 = vector.load %arg12[%c0_17, %c0_18] : memref<8x32xbf16, #tpu.memory_space<vmem>>, vector<8x8xbf16>
    tpu.vector_store %arg12[%c0_17, %c0_18], %31 {strides = array<i32>} : memref<8x32xbf16, #tpu.memory_space<vmem>>, vector<8x8xbf16>,
    %c0_19 = arith.constant 0 : index
    %c8 = arith.constant 8 : index
    %33 = vector.load %arg11[%c0_19, %c8] : memref<8x32xbf16, #tpu.memory_space<vmem>>, vector<8x8xbf16>
    %c0_20 = arith.constant 0 : index
    %c8_21 = arith.constant 8 : index
    %34 = vector.load %arg10[%c0_20, %c8_21] : memref<8x64xbf16, #tpu.memory_space<vmem>>, vector<8x8xbf16>
    %c0_22 = arith.constant 0 : index
    %c40 = arith.constant 40 : index
    %35 = vector.load %arg10[%c0_22, %c40] : memref<8x64xbf16, #tpu.memory_space<vmem>>, vector<8x8xbf16>
    %cst_23 = arith.constant dense<0.000000e+00> : vector<8x8xf32>
    %36 = tpu.matmul %33, %34, %cst_23 {dimension_numbers = #tpu.dot_dimension_numbers<[1], [1], [0], [0], [0, 0, 1, 0], [], []>} : vector<8x8xbf16>, vector<8x8xbf16>, vector<8x8xf32> -> vector<8x8xf32>
    %cst_24 = arith.constant dense<0xFF800000> : vector<8xf32>
    %37 = vector.multi_reduction <maximumf>, %36, %cst_24 [1] : vector<8x8xf32> to vector<8xf32>
    %38 = vector.shape_cast %37 : vector<8xf32> to vector<8x1xf32>
    %39 = vector.broadcast %38 : vector<8x1xf32> to vector<8x8xf32>
    %40 = arith.subf %36, %39 : vector<8x8xf32>
    %41 = math.exp %40 : vector<8x8xf32>
    %cst_25 = arith.constant dense<0.000000e+00> : vector<8xf32>
    %42 = vector.multi_reduction <add>, %41, %cst_25 [1] : vector<8x8xf32> to vector<8xf32>
    %43 = vector.shape_cast %42 : vector<8xf32> to vector<8x1xf32>
    %44 = tpu.reciprocal %43 {approx = true} : vector<8x1xf32> -> vector<8x1xf32>
    %45 = arith.truncf %41 : vector<8x8xf32> to vector<8x8xbf16>
    %cst_26 = arith.constant dense<0.000000e+00> : vector<8x8xf32>
    %46 = tpu.matmul %45, %35, %cst_26 {dimension_numbers = #tpu.dot_dimension_numbers<[1], [0], [0], [1], [0, 0, 1, 1], [], []>} : vector<8x8xbf16>, vector<8x8xbf16>, vector<8x8xf32> -> vector<8x8xf32>
    %47 = vector.broadcast %44 : vector<8x1xf32> to vector<8x8xf32>
    %48 = arith.mulf %46, %47 : vector<8x8xf32>
    %49 = arith.truncf %48 : vector<8x8xf32> to vector<8x8xbf16>
    %c0_27 = arith.constant 0 : index
    %c8_28 = arith.constant 8 : index
    %50 = vector.load %arg12[%c0_27, %c8_28] : memref<8x32xbf16, #tpu.memory_space<vmem>>, vector<8x8xbf16>
    tpu.vector_store %arg12[%c0_27, %c8_28], %49 {strides = array<i32>} : memref<8x32xbf16, #tpu.memory_space<vmem>>, vector<8x8xbf16>,
    %c0_29 = arith.constant 0 : index
    %c16 = arith.constant 16 : index
    %51 = vector.load %arg11[%c0_29, %c16] : memref<8x32xbf16, #tpu.memory_space<vmem>>, vector<8x8xbf16>
    %c0_30 = arith.constant 0 : index
    %c16_31 = arith.constant 16 : index
    %52 = vector.load %arg10[%c0_30, %c16_31] : memref<8x64xbf16, #tpu.memory_space<vmem>>, vector<8x8xbf16>
    %c0_32 = arith.constant 0 : index
    %c48 = arith.constant 48 : index
    %53 = vector.load %arg10[%c0_32, %c48] : memref<8x64xbf16, #tpu.memory_space<vmem>>, vector<8x8xbf16>
    %cst_33 = arith.constant dense<0.000000e+00> : vector<8x8xf32>
    %54 = tpu.matmul %51, %52, %cst_33 {dimension_numbers = #tpu.dot_dimension_numbers<[1], [1], [0], [0], [0, 0, 1, 0], [], []>} : vector<8x8xbf16>, vector<8x8xbf16>, vector<8x8xf32> -> vector<8x8xf32>
    %cst_34 = arith.constant dense<0xFF800000> : vector<8xf32>
    %55 = vector.multi_reduction <maximumf>, %54, %cst_34 [1] : vector<8x8xf32> to vector<8xf32>
    %56 = vector.shape_cast %55 : vector<8xf32> to vector<8x1xf32>
    %57 = vector.broadcast %56 : vector<8x1xf32> to vector<8x8xf32>
    %58 = arith.subf %54, %57 : vector<8x8xf32>
    %59 = math.exp %58 : vector<8x8xf32>
    %cst_35 = arith.constant dense<0.000000e+00> : vector<8xf32>
    %60 = vector.multi_reduction <add>, %59, %cst_35 [1] : vector<8x8xf32> to vector<8xf32>
    %61 = vector.shape_cast %60 : vector<8xf32> to vector<8x1xf32>
    %62 = tpu.reciprocal %61 {approx = true} : vector<8x1xf32> -> vector<8x1xf32>
    %63 = arith.truncf %59 : vector<8x8xf32> to vector<8x8xbf16>
    %cst_36 = arith.constant dense<0.000000e+00> : vector<8x8xf32>
    %64 = tpu.matmul %63, %53, %cst_36 {dimension_numbers = #tpu.dot_dimension_numbers<[1], [0], [0], [1], [0, 0, 1, 1], [], []>} : vector<8x8xbf16>, vector<8x8xbf16>, vector<8x8xf32> -> vector<8x8xf32>
    %65 = vector.broadcast %62 : vector<8x1xf32> to vector<8x8xf32>
    %66 = arith.mulf %64, %65 : vector<8x8xf32>
    %67 = arith.truncf %66 : vector<8x8xf32> to vector<8x8xbf16>
    %c0_37 = arith.constant 0 : index
    %c16_38 = arith.constant 16 : index
    %68 = vector.load %arg12[%c0_37, %c16_38] : memref<8x32xbf16, #tpu.memory_space<vmem>>, vector<8x8xbf16>
    tpu.vector_store %arg12[%c0_37, %c16_38], %67 {strides = array<i32>} : memref<8x32xbf16, #tpu.memory_space<vmem>>, vector<8x8xbf16>,
    %c0_39 = arith.constant 0 : index
    %c24 = arith.constant 24 : index
    %69 = vector.load %arg11[%c0_39, %c24] : memref<8x32xbf16, #tpu.memory_space<vmem>>, vector<8x8xbf16>
    %c0_40 = arith.constant 0 : index
    %c24_41 = arith.constant 24 : index
    %70 = vector.load %arg10[%c0_40, %c24_41] : memref<8x64xbf16, #tpu.memory_space<vmem>>, vector<8x8xbf16>
    %c0_42 = arith.constant 0 : index
    %c56 = arith.constant 56 : index
    %71 = vector.load %arg10[%c0_42, %c56] : memref<8x64xbf16, #tpu.memory_space<vmem>>, vector<8x8xbf16>
    %cst_43 = arith.constant dense<0.000000e+00> : vector<8x8xf32>
    %72 = tpu.matmul %69, %70, %cst_43 {dimension_numbers = #tpu.dot_dimension_numbers<[1], [1], [0], [0], [0, 0, 1, 0], [], []>} : vector<8x8xbf16>, vector<8x8xbf16>, vector<8x8xf32> -> vector<8x8xf32>
    %cst_44 = arith.constant dense<0xFF800000> : vector<8xf32>
    %73 = vector.multi_reduction <maximumf>, %72, %cst_44 [1] : vector<8x8xf32> to vector<8xf32>
    %74 = vector.shape_cast %73 : vector<8xf32> to vector<8x1xf32>
    %75 = vector.broadcast %74 : vector<8x1xf32> to vector<8x8xf32>
    %76 = arith.subf %72, %75 : vector<8x8xf32>
    %77 = math.exp %76 : vector<8x8xf32>
    %cst_45 = arith.constant dense<0.000000e+00> : vector<8xf32>
    %78 = vector.multi_reduction <add>, %77, %cst_45 [1] : vector<8x8xf32> to vector<8xf32>
    %79 = vector.shape_cast %78 : vector<8xf32> to vector<8x1xf32>
    %80 = tpu.reciprocal %79 {approx = true} : vector<8x1xf32> -> vector<8x1xf32>
    %81 = arith.truncf %77 : vector<8x8xf32> to vector<8x8xbf16>
    %cst_46 = arith.constant dense<0.000000e+00> : vector<8x8xf32>
    %82 = tpu.matmul %81, %71, %cst_46 {dimension_numbers = #tpu.dot_dimension_numbers<[1], [0], [0], [1], [0, 0, 1, 1], [], []>} : vector<8x8xbf16>, vector<8x8xbf16>, vector<8x8xf32> -> vector<8x8xf32>
    %83 = vector.broadcast %80 : vector<8x1xf32> to vector<8x8xf32>
    %84 = arith.mulf %82, %83 : vector<8x8xf32>
    %85 = arith.truncf %84 : vector<8x8xf32> to vector<8x8xbf16>
    %c0_47 = arith.constant 0 : index
    %c24_48 = arith.constant 24 : index
    %86 = vector.load %arg12[%c0_47, %c24_48] : memref<8x32xbf16, #tpu.memory_space<vmem>>, vector<8x8xbf16>
    tpu.vector_store %arg12[%c0_47, %c24_48], %85 {strides = array<i32>} : memref<8x32xbf16, #tpu.memory_space<vmem>>, vector<8x8xbf16>,
    %c0_49 = arith.constant 0 : index
    %c0_50 = arith.constant 0 : index
    %87 = vector.load %arg12[%c0_49, %c0_50] : memref<8x32xbf16, #tpu.memory_space<vmem>>, vector<8x32xbf16>
    %c0_51 = arith.constant 0 : index
    %c0_52 = arith.constant 0 : index
    %88 = vector.load %arg7[%c0_51, %c0_52] : memref<32x32xbf16, #tpu.memory_space<vmem>>, vector<32x32xbf16>
    %cst_53 = arith.constant dense<0.000000e+00> : vector<8x32xf32>
    %89 = tpu.matmul %87, %88, %cst_53 {dimension_numbers = #tpu.dot_dimension_numbers<[1], [0], [0], [1], [0, 0, 1, 1], [], []>} : vector<8x32xbf16>, vector<32x32xbf16>, vector<8x32xf32> -> vector<8x32xf32>
    %c0_54 = arith.constant 0 : index
    %c0_55 = arith.constant 0 : index
    %90 = vector.load %arg8[%c0_54, %c0_55] : memref<1x32xf32, #tpu.memory_space<vmem>>, vector<1x32xf32>
    %91 = vector.broadcast %90 : vector<1x32xf32> to vector<8x32xf32>
    %92 = arith.addf %89, %91 : vector<8x32xf32>
    %c0_56 = arith.constant 0 : index
    %c0_57 = arith.constant 0 : index
    %c0_58 = arith.constant 0 : index
    %93 = vector.load %arg9[%c0_56, %c0_57, %c0_58] : memref<1x8x32xf32, #tpu.memory_space<vmem>>, vector<1x8x32xf32>
    %94 = vector.shape_cast %93 : vector<1x8x32xf32> to vector<8x32xf32>
    %95 = vector.shape_cast %92 : vector<8x32xf32> to vector<1x8x32xf32>
    tpu.vector_store %arg9[%c0_56, %c0_57, %c0_58], %95 {strides = array<i32>} : memref<1x8x32xf32, #tpu.memory_space<vmem>>, vector<1x8x32xf32>,
    return
  }
  func.func @transform_0(%arg0: i32, %arg1: i32) -> (i32, i32, i32) {
    %c0_i32 = arith.constant 0 : i32
    %c0_i32_0 = arith.constant 0 : i32
    %c0_i32_1 = arith.constant 0 : i32
    return %arg0, %c0_i32, %c0_i32_0 : i32, i32, i32
  }
  func.func @transform_1(%arg0: i32, %arg1: i32) -> (i32, i32) {
    %c0_i32 = arith.constant 0 : i32
    %c0_i32_0 = arith.constant 0 : i32
    %c0_i32_1 = arith.constant 0 : i32
    return %c0_i32, %c0_i32_0 : i32, i32
  }
  func.func @transform_2(%arg0: i32, %arg1: i32) -> (i32, i32) {
    %c0_i32 = arith.constant 0 : i32
    %c0_i32_0 = arith.constant 0 : i32
    %c0_i32_1 = arith.constant 0 : i32
    return %c0_i32, %c0_i32_0 : i32, i32
  }
  func.func @transform_3(%arg0: i32, %arg1: i32) -> (i32, i32) {
    %c0_i32 = arith.constant 0 : i32
    %c0_i32_0 = arith.constant 0 : i32
    %c0_i32_1 = arith.constant 0 : i32
    return %c0_i32, %c0_i32_0 : i32, i32
  }
  func.func @transform_4(%arg0: i32, %arg1: i32) -> (i32, i32) {
    %c0_i32 = arith.constant 0 : i32
    %c0_i32_0 = arith.constant 0 : i32
    %c0_i32_1 = arith.constant 0 : i32
    return %c0_i32, %c0_i32_0 : i32, i32
  }
  func.func @transform_5(%arg0: i32, %arg1: i32) -> (i32, i32) {
    %c0_i32 = arith.constant 0 : i32
    %c0_i32_0 = arith.constant 0 : i32
    %c0_i32_1 = arith.constant 0 : i32
    return %c0_i32, %c0_i32_0 : i32, i32
  }
  func.func @transform_6(%arg0: i32, %arg1: i32) -> (i32, i32) {
    %c0_i32 = arith.constant 0 : i32
    %c0_i32_0 = arith.constant 0 : i32
    %c0_i32_1 = arith.constant 0 : i32
    return %c0_i32, %c0_i32_0 : i32, i32
  }
  func.func @transform_7(%arg0: i32, %arg1: i32) -> (i32, i32, i32) {
    %c0_i32 = arith.constant 0 : i32
    %c0_i32_0 = arith.constant 0 : i32
    return %arg0, %arg1, %c0_i32 : i32, i32, i32
  }
}

</mosaic_0001>

<llo_original>
// kernel: tpu_custom_call.1
$region0: #{tpu_custom_call.1}
  #allocation0 [shape = 'u32[]', space=smem, size = 0x4, offset = 0x4, fixed_abs, tag = 'smem constant byte address 0x4 - core index']
  #allocation1 [shape = 'u32[144,128]{1,0:T(1,128)}', space=vmem, size = 0x12000, scoped, tag = 'internal scratch']
  #allocation2 [shape = 'bf16[8,64]{1,0:T(8,128)(2,1)}', space=vmem, size = 0x800, scoped, tag = 'scratch operand']
  #allocation3 [shape = 'bf16[8,32]{1,0:T(8,128)(2,1)}', space=vmem, size = 0x800, scoped, tag = 'scratch operand']
  #allocation4 [shape = 'bf16[8,32]{1,0:T(8,128)(2,1)}', space=vmem, size = 0x800, scoped, tag = 'scratch operand']
  %s0 = inlined_call_operand.hbm [shape: bf16[2,8,32], index: 0, kind: input, shape index: {}]
  %s1 = inlined_call_operand.hbm [shape: bf16[32,32], index: 1, kind: input, shape index: {}]
  %s2 = inlined_call_operand.vmem [shape: f32[1,32], index: 2, kind: input, shape index: {}]
  %s3 = inlined_call_operand.hbm [shape: bf16[32,64], index: 3, kind: input, shape index: {}]
  %s4 = inlined_call_operand.vmem [shape: f32[1,64], index: 4, kind: input, shape index: {}]
  %s5 = inlined_call_operand.vmem [shape: bf16[32,32], index: 5, kind: input, shape index: {}]
  %s6 = inlined_call_operand.vmem [shape: f32[1,32], index: 6, kind: input, shape index: {}]
  %s7 = inlined_call_operand.hbm [shape: f32[2,8,32], index: 7, kind: output, shape index: {}]
  %s8 = sld [smem:[#allocation0]]
  $region77: #{tpu_custom_call.1} parent=0
    _
  %s10 = ssub.s32 1, %s8
  %s11 = scalar_select 0, %s10, %s8
  $region1: #{tpu_custom_call.1} parent=0
    #allocation5 [shape = 'u8[4096]{0}', space=vmem, size = 0x1000, scoped, tag = 'input window, operand 0']
    #allocation6 [shape = 's32[2]{0}', space=sflag, size = 0x8, scoped, tag = 'scoped memory for tpu_custom_call.1']
    #allocation7 [shape = 's32[2]{0}', space=sflag, size = 0x8, scoped, tag = 'scoped memory for tpu_custom_call.1']
    #allocation8 [shape = 'u8[8192]{0}', space=vmem, size = 0x2000, scoped, tag = 'input window, operand 1, single buffered']
    #allocation9 [shape = 's32[1]{0}', space=sflag, size = 0x4, scoped, tag = 'scoped memory for tpu_custom_call.1']
    #allocation10 [shape = 'u8[8192]{0}', space=vmem, size = 0x2000, scoped, tag = 'input window, operand 3, single buffered']
    #allocation11 [shape = 'u8[8192]{0}', space=vmem, size = 0x2000, scoped, tag = 'output window, operand 0']
    %12 = vsyncpa [#allocation6], 0
    %s13 = scalar_lea.sflag [#allocation6], 1
    %14 = vsyncpa %s13, 0
    %15 = vsyncpa [#allocation9], 0
    %16 = vsyncpa [#allocation7], 0
    %s17 = scalar_lea.sflag [#allocation7], 1
    %18 = vsyncpa %s17, 0
    loop: start=0, step=1, limit=4
    $region2: #{tpu_custom_call.1} parent=1 // loop_pre_header
      _
    $region3: #{tpu_custom_call.1} parent=1 // loop_header
      %s20 = sphi 0, %s24
      %p21 = scmp.ge.s32.totalorder %s20, 4
      %s27 = sphi 0, %s39
      %s28 = sphi 0, %s35
      %s29 = sphi 0, %s27
      %s30 = sphi 0, %s28
      %s31 = sphi 0, %s29
      %s32 = sphi 0, %s30
      %s42 = sphi 0, %s44
      %s45 = sphi 0, %s42
      %s46 = sphi 0, %s45
      %s62 = sphi 0, %s46
      %s66 = sphi 0, %s66
      %s68 = sphi 0, %s66
      %s69 = sphi 0, %s68
      %s83 = sphi 0, %s69
      %s87 = sphi 0, %s87
      %s89 = sphi 0, %s87
      %s90 = sphi 0, %s89
      %s104 = sphi 0, %s90
      %s108 = sphi 0, %s108
      %s110 = sphi 0, %s108
      %s111 = sphi 0, %s110
      %s125 = sphi 0, %s111
      %s129 = sphi 0, %s129
      %s131 = sphi 0, %s129
      %s132 = sphi 0, %s131
      %s146 = sphi 0, %s132
      %s150 = sphi 0, %s150
      %s152 = sphi 0, %s150
      %s153 = sphi 0, %s152
      %s167 = sphi 0, %s153
      %s171 = sphi 0, %s171
      %s173 = sphi 0, %s171
      %s174 = sphi 0, %s173
      %s188 = sphi 0, %s174
      %s196 = sphi 0, %s198
      %s199 = sphi 0, %s196
      %s200 = sphi 0, %s199
      %s216 = sphi 0, %s200
    $region4: #{tpu_custom_call.1} parent=1 // loop_header_branch
      %23 = sbr.rel (%p21) target = $region8
    $region5: #{tpu_custom_call.1} parent=1 // loop_body
      %s25 = ssub.s32 %s20, 1
      %s26 = ssub.s32 %s20, 2
      %s33 = sadd.s32 1, %s28
      %p34 = scmp.ge.s32.totalorder %s33, 1
      %s35 = scalar_select %p34, 0, %s33
      %s36 = sadd.s32 1, %s27
      %s37 = scalar_select %p34, %s36, %s27
      %p38 = scmp.ge.s32.totalorder %s37, 2
      %s39 = scalar_select %p38, 0, %s37
      %s40 = ssub.s32 %s27, %s39
      %p41 = scmp.eq.s32.totalorder %s40, 0
      %s43 = sadd.s32 %s42, 1
      %s44 = scalar_select %p41, %s42, %s43
      %p47 = pneg %p41
      %p48 = scmp.eq.s32.totalorder %s20, 1
      %p49 = por %p47, %p48
      %p50 = scmp.ne.s32.totalorder %s42, %s45
      %p51 = scmp.eq.s32.totalorder %s20, 0
      %p52 = por %p50, %p51
      %p53 = scmp.ne.s32.totalorder %s42, %s45
      %p54 = scmp.eq.s32.totalorder %s25, 1
      %p55 = por %p53, %p54
      %p56 = scmp.ne.s32.totalorder %s45, %s46
      %p57 = scmp.eq.s32.totalorder %s25, 0
      %p58 = por %p56, %p57
      %p59 = scmp.ne.s32.totalorder %s45, %s46
      %p60 = scmp.eq.s32.totalorder %s26, 1
      %p61 = por %p59, %p60
      %p63 = scmp.ne.s32.totalorder %s46, %s62
      %p64 = scmp.eq.s32.totalorder %s26, 0
      %p65 = por %p63, %p64
      %s67 = sadd.s32 %s66, 1
      %p70 = scmp.eq.s32.totalorder %s20, 1
      %p71 = scmp.ne.s32.totalorder %s66, %s68
      %p72 = scmp.eq.s32.totalorder %s20, 0
      %p73 = por %p71, %p72
      %p74 = scmp.ne.s32.totalorder %s66, %s68
      %p75 = scmp.eq.s32.totalorder %s25, 1
      %p76 = por %p74, %p75
      %p77 = scmp.ne.s32.totalorder %s68, %s69
      %p78 = scmp.eq.s32.totalorder %s25, 0
      %p79 = por %p77, %p78
      %p80 = scmp.ne.s32.totalorder %s68, %s69
      %p81 = scmp.eq.s32.totalorder %s26, 1
      %p82 = por %p80, %p81
      %p84 = scmp.ne.s32.totalorder %s69, %s83
      %p85 = scmp.eq.s32.totalorder %s26, 0
      %p86 = por %p84, %p85
      %s88 = sadd.s32 %s87, 1
      %p91 = scmp.eq.s32.totalorder %s20, 1
      %p92 = scmp.ne.s32.totalorder %s87, %s89
      %p93 = scmp.eq.s32.totalorder %s20, 0
      %p94 = por %p92, %p93
      %p95 = scmp.ne.s32.totalorder %s87, %s89
      %p96 = scmp.eq.s32.totalorder %s25, 1
      %p97 = por %p95, %p96
      %p98 = scmp.ne.s32.totalorder %s89, %s90
      %p99 = scmp.eq.s32.totalorder %s25, 0
      %p100 = por %p98, %p99
      %p101 = scmp.ne.s32.totalorder %s89, %s90
      %p102 = scmp.eq.s32.totalorder %s26, 1
      %p103 = por %p101, %p102
      %p105 = scmp.ne.s32.totalorder %s90, %s104
      %p106 = scmp.eq.s32.totalorder %s26, 0
      %p107 = por %p105, %p106
      %s109 = sadd.s32 %s108, 1
      %p112 = scmp.eq.s32.totalorder %s20, 1
      %p113 = scmp.ne.s32.totalorder %s108, %s110
      %p114 = scmp.eq.s32.totalorder %s20, 0
      %p115 = por %p113, %p114
      %p116 = scmp.ne.s32.totalorder %s108, %s110
      %p117 = scmp.eq.s32.totalorder %s25, 1
      %p118 = por %p116, %p117
      %p119 = scmp.ne.s32.totalorder %s110, %s111
      %p120 = scmp.eq.s32.totalorder %s25, 0
      %p121 = por %p119, %p120
      %p122 = scmp.ne.s32.totalorder %s110, %s111
      %p123 = scmp.eq.s32.totalorder %s26, 1
      %p124 = por %p122, %p123
      %p126 = scmp.ne.s32.totalorder %s111, %s125
      %p127 = scmp.eq.s32.totalorder %s26, 0
      %p128 = por %p126, %p127
      %s130 = sadd.s32 %s129, 1
      %p133 = scmp.eq.s32.totalorder %s20, 1
      %p134 = scmp.ne.s32.totalorder %s129, %s131
      %p135 = scmp.eq.s32.totalorder %s20, 0
      %p136 = por %p134, %p135
      %p137 = scmp.ne.s32.totalorder %s129, %s131
      %p138 = scmp.eq.s32.totalorder %s25, 1
      %p139 = por %p137, %p138
      %p140 = scmp.ne.s32.totalorder %s131, %s132
      %p141 = scmp.eq.s32.totalorder %s25, 0
      %p142 = por %p140, %p141
      %p143 = scmp.ne.s32.totalorder %s131, %s132
      %p144 = scmp.eq.s32.totalorder %s26, 1
      %p145 = por %p143, %p144
      %p147 = scmp.ne.s32.totalorder %s132, %s146
      %p148 = scmp.eq.s32.totalorder %s26, 0
      %p149 = por %p147, %p148
      %s151 = sadd.s32 %s150, 1
      %p154 = scmp.eq.s32.totalorder %s20, 1
      %p155 = scmp.ne.s32.totalorder %s150, %s152
      %p156 = scmp.eq.s32.totalorder %s20, 0
      %p157 = por %p155, %p156
      %p158 = scmp.ne.s32.totalorder %s150, %s152
      %p159 = scmp.eq.s32.totalorder %s25, 1
      %p160 = por %p158, %p159
      %p161 = scmp.ne.s32.totalorder %s152, %s153
      %p162 = scmp.eq.s32.totalorder %s25, 0
      %p163 = por %p161, %p162
      %p164 = scmp.ne.s32.totalorder %s152, %s153
      %p165 = scmp.eq.s32.totalorder %s26, 1
      %p166 = por %p164, %p165
      %p168 = scmp.ne.s32.totalorder %s153, %s167
      %p169 = scmp.eq.s32.totalorder %s26, 0
      %p170 = por %p168, %p169
      %s172 = sadd.s32 %s171, 1
      %p175 = scmp.eq.s32.totalorder %s20, 1
      %p176 = scmp.ne.s32.totalorder %s171, %s173
      %p177 = scmp.eq.s32.totalorder %s20, 0
      %p178 = por %p176, %p177
      %p179 = scmp.ne.s32.totalorder %s171, %s173
      %p180 = scmp.eq.s32.totalorder %s25, 1
      %p181 = por %p179, %p180
      %p182 = scmp.ne.s32.totalorder %s173, %s174
      %p183 = scmp.eq.s32.totalorder %s25, 0
      %p184 = por %p182, %p183
      %p185 = scmp.ne.s32.totalorder %s173, %s174
      %p186 = scmp.eq.s32.totalorder %s26, 1
      %p187 = por %p185, %p186
      %p189 = scmp.ne.s32.totalorder %s174, %s188
      %p190 = scmp.eq.s32.totalorder %s26, 0
      %p191 = por %p189, %p190
      %s192 = ssub.s32 %s27, %s39
      %s193 = ssub.s32 %s28, %s35
      %s194 = sor.u32 %s192, %s193
      %p195 = scmp.eq.s32.totalorder %s194, 0
      %s197 = sadd.s32 %s196, 1
      %s198 = scalar_select %p195, %s196, %s197
      %p201 = pneg %p195
      %p202 = scmp.eq.s32.totalorder %s20, 1
      %p203 = por %p201, %p202
      %p204 = scmp.ne.s32.totalorder %s196, %s199
      %p205 = scmp.eq.s32.totalorder %s20, 0
      %p206 = por %p204, %p205
      %p207 = scmp.ne.s32.totalorder %s196, %s199
      %p208 = scmp.eq.s32.totalorder %s25, 1
      %p209 = por %p207, %p208
      %p210 = scmp.ne.s32.totalorder %s199, %s200
      %p211 = scmp.eq.s32.totalorder %s25, 0
      %p212 = por %p210, %p211
      %p213 = scmp.ne.s32.totalorder %s199, %s200
      %p214 = scmp.eq.s32.totalorder %s26, 1
      %p215 = por %p213, %p214
      %p217 = scmp.ne.s32.totalorder %s200, %s216
      %p218 = scmp.eq.s32.totalorder %s26, 0
      %p219 = por %p217, %p218
      %p220 = scmp.le.s32.totalorder 1, %s20
      %p221 = scmp.lt.s32.totalorder %s20, 3
      %p222 = pnand %p220, %p221
      %p223 = pneg %p222
      // Predicated region
      $region9: #{tpu_custom_call.1} parent=5 // pred_check
        _
      $region10: #{tpu_custom_call.1} parent=5 // pred_check_branch
        %225 = sbr.rel (%p222) target = $region12
      $region11: #{tpu_custom_call.1} parent=5 // pred_region
        %s226 = ssub.s32 %s20, 1
        // Predicated region
        $region13: #{tpu_custom_call.1} parent=11 // pred_check
          %p227 = pneg %p79
        $region14: #{tpu_custom_call.1} parent=11 // pred_check_branch
          %229 = sbr.rel (%p227) target = $region16
        $region15: #{tpu_custom_call.1} parent=11 // pred_region
          %s231 = ssub.s32 256, 256
          %232 = vsyncadd [#allocation9], %s231
          %s233 = sshll.u32 [#allocation8], 4
          %s234 = int_to_ptr.vmem [resolvable:$true] %s233
          %239 = dma.hbm_to_vmem [thread:$0]  %s1, 256, %s234, [#allocation9], 64, 64, 4
        $region16: #{tpu_custom_call.1} parent=11 // pred_fallthru
          _
        // Predicated region
        $region17: #{tpu_custom_call.1} parent=11 // pred_check
          %p240 = pneg %p100
        $region18: #{tpu_custom_call.1} parent=11 // pred_check_branch
          %242 = sbr.rel (%p240) target = $region20
        $region19: #{tpu_custom_call.1} parent=11 // pred_region
          _
        $region20: #{tpu_custom_call.1} parent=11 // pred_fallthru
          _
        // Predicated region
        $region21: #{tpu_custom_call.1} parent=11 // pred_check
          %p243 = pneg %p121
        $region22: #{tpu_custom_call.1} parent=11 // pred_check_branch
          %245 = sbr.rel (%p243) target = $region24
        $region23: #{tpu_custom_call.1} parent=11 // pred_region
          %s247 = ssub.s32 256, 256
          %248 = vsyncadd [#allocation9], %s247
          %s249 = sshll.u32 [#allocation10], 4
          %s250 = int_to_ptr.vmem [resolvable:$true] %s249
          %255 = dma.hbm_to_vmem [thread:$0]  %s3, 256, %s250, [#allocation9], 64, 64, 4
        $region24: #{tpu_custom_call.1} parent=11 // pred_fallthru
          _
        // Predicated region
        $region25: #{tpu_custom_call.1} parent=11 // pred_check
          %p256 = pneg %p142
        $region26: #{tpu_custom_call.1} parent=11 // pred_check_branch
          %258 = sbr.rel (%p256) target = $region28
        $region27: #{tpu_custom_call.1} parent=11 // pred_region
          _
        $region28: #{tpu_custom_call.1} parent=11 // pred_fallthru
          _
        // Predicated region
        $region29: #{tpu_custom_call.1} parent=11 // pred_check
          %p259 = pneg %p163
        $region30: #{tpu_custom_call.1} parent=11 // pred_check_branch
          %261 = sbr.rel (%p259) target = $region32
        $region31: #{tpu_custom_call.1} parent=11 // pred_region
          _
        $region32: #{tpu_custom_call.1} parent=11 // pred_fallthru
          _
        // Predicated region
        $region33: #{tpu_custom_call.1} parent=11 // pred_check
          %p262 = pneg %p184
        $region34: #{tpu_custom_call.1} parent=11 // pred_check_branch
          %264 = sbr.rel (%p262) target = $region36
        $region35: #{tpu_custom_call.1} parent=11 // pred_region
          _
        $region36: #{tpu_custom_call.1} parent=11 // pred_fallthru
          _
      $region12: #{tpu_custom_call.1} parent=5 // pred_fallthru
        _
      %p265 = scmp.lt.s32.totalorder %s20, 2
      // Predicated region
      $region37: #{tpu_custom_call.1} parent=5 // pred_check
        %p266 = pneg %p265
      $region38: #{tpu_custom_call.1} parent=5 // pred_check_branch
        %268 = sbr.rel (%p266) target = $region40
      $region39: #{tpu_custom_call.1} parent=5 // pred_region
        // Predicated region
        $region41: #{tpu_custom_call.1} parent=39 // pred_check
          %p269 = pneg %p52
        $region42: #{tpu_custom_call.1} parent=39 // pred_check_branch
          %271 = sbr.rel (%p269) target = $region44
        $region43: #{tpu_custom_call.1} parent=39 // pred_region
          %s272 = sand.u32 %s42, 1
          %s273 = scalar_lea.sflag [#allocation6], %s272
          %s274 = sand.u32 %s42, 1
          %s275 = smul.addr %s274, 4
          %s276 = scalar_lea.vmem [#allocation5], %s275
          %s278 = ssub.s32 64, 64
          %279 = vsyncadd %s273, %s278
          %s280 = smul.addr %s27, 64
          %s281 = scalar_lea.hbm %s0, %s280
          %s283 = sshll.u32 %s276, 4
          %s284 = int_to_ptr.vmem [resolvable:$true] %s283
          %286 = dma.hbm_to_vmem [thread:$0]  %s281, 64, %s284, %s273
        $region44: #{tpu_custom_call.1} parent=39 // pred_fallthru
          _
      $region40: #{tpu_custom_call.1} parent=5 // pred_fallthru
        _
      %p287 = scmp.le.s32.totalorder 1, %s20
      %p288 = scmp.lt.s32.totalorder %s20, 3
      %p289 = pnand %p287, %p288
      %p290 = pneg %p289
      // Predicated region
      $region45: #{tpu_custom_call.1} parent=5 // pred_check
        _
      $region46: #{tpu_custom_call.1} parent=5 // pred_check_branch
        %292 = sbr.rel (%p289) target = $region48
      $region47: #{tpu_custom_call.1} parent=5 // pred_region
        %s293 = ssub.s32 %s20, 1
        %s294 = sand.u32 %s45, 1
        %s295 = scalar_lea.sflag [#allocation6], %s294
        %s296 = sand.u32 %s45, 1
        %s297 = smul.addr %s296, 4
        %s298 = scalar_lea.vmem [#allocation5], %s297
        // Predicated region
        $region49: #{tpu_custom_call.1} parent=47 // pred_check
          %p299 = pneg %p58
        $region50: #{tpu_custom_call.1} parent=47 // pred_check_branch
          %301 = sbr.rel (%p299) target = $region52
        $region51: #{tpu_custom_call.1} parent=47 // pred_region
          %302 = dma.done %s295, 64
        $region52: #{tpu_custom_call.1} parent=47 // pred_fallthru
          _
        // Predicated region
        $region53: #{tpu_custom_call.1} parent=47 // pred_check
          %p303 = pneg %p79
        $region54: #{tpu_custom_call.1} parent=47 // pred_check_branch
          %305 = sbr.rel (%p303) target = $region56
        $region55: #{tpu_custom_call.1} parent=47 // pred_region
          %306 = dma.done [#allocation9], 256
        $region56: #{tpu_custom_call.1} parent=47 // pred_fallthru
          _
        // Predicated region
        $region57: #{tpu_custom_call.1} parent=47 // pred_check
          %p307 = pneg %p121
        $region58: #{tpu_custom_call.1} parent=47 // pred_check_branch
          %309 = sbr.rel (%p307) target = $region60
        $region59: #{tpu_custom_call.1} parent=47 // pred_region
          %310 = dma.done [#allocation9], 256
        $region60: #{tpu_custom_call.1} parent=47 // pred_fallthru
          _
        %s311 = sand.u32 %s45, 1
        %s312 = scalar_lea.sflag [#allocation6], %s311
        %s313 = sand.u32 %s45, 1
        %s314 = smul.addr %s313, 4
        %s315 = scalar_lea.vmem [#allocation5], %s314
        %p316 = pneg %p58
        %p317 = pneg %p55
        %p318 = pneg %p79
        %p319 = pneg %p76
        %p320 = pneg %p100
        %p321 = pneg %p97
        %p322 = pneg %p121
        %p323 = pneg %p118
        %p324 = pneg %p142
        %p325 = pneg %p139
        %p326 = pneg %p163
        %p327 = pneg %p160
        %p328 = pneg %p184
        %p329 = pneg %p181
        %p330 = pneg %p212
        %p331 = pneg %p209
        %s332 = sand.u32 %s199, 1
        %s333 = scalar_lea.sflag [#allocation7], %s332
        %s334 = sand.u32 %s199, 1
        %s335 = smul.addr %s334, 8
        %s336 = scalar_lea.vmem [#allocation11], %s335
        %p338 = scmp.eq.s32.totalorder %s30, 0
        // Predicated region
        $region61: #{tpu_custom_call.1} parent=47 // pred_check
          %p339 = pneg %p338
        $region62: #{tpu_custom_call.1} parent=47 // pred_check_branch
          %341 = sbr.rel (%p339) target = $region64
        $region63: #{tpu_custom_call.1} parent=47 // pred_region
          %v342 = vld [vmem:[%s298] sm:$0xf]
          %v343 = vld [vmem:[#allocation10] sm:$0xf]
          %v344 = vld [vmem:[#allocation10 + $0x4] sm:$0xf]
          %v345 = vld [vmem:[#allocation10 + $0x8] sm:$0xf]
          %v346 = vld [vmem:[#allocation10 + $0xc] sm:$0xf]
          %v347 = vld [vmem:[%s4] sm:$0x1]
          %v349 = vlaneseq
          %v350 = vshrl.u32 %v349, 7
          %v351 = vsub.s32 0, %v350
          %v352 = vrot.slane %v347, %v351
          %v358 = vunpack.c.l.b16 %v343
          %v359 = vunpack.c.l.b16 %v344
          %v360 = vunpack.c.l.b16 %v345
          %v361 = vunpack.c.l.b16 %v346
          %v362 = vpack.c.b16 %v359, %v358
          %v363 = vpack.c.b16 %v361, %v360
          %vm366 = vcmask 261120
          %v368 = vsel %vm366, %v342, 0
          %370 = vmatprep.subr.bf16.mxu0 0
          %371 = vmatpush1.bf16.msra.mxu0 %v362
          %372 = vmatprep.subr.bf16.mxu0 0
          %373 = vmatpush1.bf16.msra.mxu0 %v363
          %374 = vmatprep.subr.bf16.mxu0 0
          %375 = vmatpush1.bf16.msra.mxu0 0
          %376 = vmatprep.subr.bf16.mxu0 0
          %377 = vmatpush1.bf16.msra.mxu0 0
          %378 = vmatprep.subr.bf16.mxu0 0
          %379 = vmatpush1.bf16.msra.mxu0 0
          %380 = vmatprep.subr.bf16.mxu0 0
          %381 = vmatpush1.bf16.msra.mxu0 0
          %382 = vmatprep.subr.bf16.mxu0 0
          %383 = vmatpush1.bf16.msra.mxu0 0
          %384 = vmatprep.subr.bf16.mxu0 0
          %385 = vmatpush1.bf16.msra.mxu0 0
          %386 = vmatprep.subr.bf16.mxu0 0
          %387 = vmatpush1.bf16.msra.mxu0 0
          %388 = vmatprep.subr.bf16.mxu0 0
          %389 = vmatpush1.bf16.msra.mxu0 0
          %390 = vmatprep.subr.bf16.mxu0 0
          %391 = vmatpush1.bf16.msra.mxu0 0
          %392 = vmatprep.subr.bf16.mxu0 0
          %393 = vmatpush1.bf16.msra.mxu0 0
          %394 = vmatprep.subr.bf16.mxu0 0
          %395 = vmatpush1.bf16.msra.mxu0 0
          %396 = vmatprep.subr.bf16.mxu0 0
          %397 = vmatpush1.bf16.msra.mxu0 0
          %398 = vmatprep.subr.bf16.mxu0 0
          %399 = vmatpush1.bf16.msra.mxu0 0
          %400 = vmatprep.subr.bf16.mxu0 0
          %401 = vmatpush1.bf16.msra.mxu0 0
          %402 = vmatprep.mubr.bf16.mxu0 0
          %403 = vmatmul.mubr.bf16.gmra.mrb[0].mxu0 %v368
          %v404 = vpop.f32.mrb[0].mxu0
          %v405 = vadd.f32 %v352, %v404
          %v406 = vpop.f32.mrb[0].mxu0
          %v407 = vpop.f32.mrb[0].mxu0
          %v408 = vpop.f32.mrb[0].mxu0
          %409 = vdwg.mxu0
          %v410 = vpack.c.bf16 %v405, %v405
          %vm411 = vcmask 519168
          %412 = vst.msk [vmem:[#allocation2] sm:$0xf] %vm411, %v410
        $region64: #{tpu_custom_call.1} parent=47 // pred_fallthru
          _
        %s413 = smul.u32 %s30, 8
        %s414 = sshra.s32 %s413, 3
        %s415 = sand.u32 %s413, 7
        %s416 = smul.addr %s414, 4
        %s417 = scalar_lea.vmem %s298, %s416 [#allocation5]
        %v418 = vld [vmem:[%s417] sm:$0xf]
        %v419 = vld [vmem:[#allocation8] sm:$0xf]
        %v420 = vld [vmem:[#allocation8 + $0x4] sm:$0xf]
        %v421 = vld [vmem:[#allocation8 + $0x8] sm:$0xf]
        %v422 = vld [vmem:[#allocation8 + $0xc] sm:$0xf]
        %v423 = vld [vmem:[%s2] sm:$0x1]
        %v425 = vlaneseq
        %v426 = vshrl.u32 %v425, 7
        %v427 = vsub.s32 0, %v426
        %v428 = vrot.slane %v423, %v427
        %v434 = vunpack.c.l.b16 %v419
        %v435 = vunpack.c.l.b16 %v420
        %v436 = vunpack.c.l.b16 %v421
        %v437 = vunpack.c.l.b16 %v422
        %v438 = vpack.c.b16 %v435, %v434
        %v439 = vpack.c.b16 %v437, %v436
        %vm442 = vcmask 261120
        %v444 = vsel %vm442, %v418, 0
        %446 = vmatprep.subr.bf16.mxu0 0
        %447 = vmatpush1.bf16.msra.mxu0 %v438
        %448 = vmatprep.subr.bf16.mxu0 0
        %449 = vmatpush1.bf16.msra.mxu0 %v439
        %450 = vmatprep.subr.bf16.mxu0 0
        %451 = vmatpush1.bf16.msra.mxu0 0
        %452 = vmatprep.subr.bf16.mxu0 0
        %453 = vmatpush1.bf16.msra.mxu0 0
        %454 = vmatprep.subr.bf16.mxu0 0
        %455 = vmatpush1.bf16.msra.mxu0 0
        %456 = vmatprep.subr.bf16.mxu0 0
        %457 = vmatpush1.bf16.msra.mxu0 0
        %458 = vmatprep.subr.bf16.mxu0 0
        %459 = vmatpush1.bf16.msra.mxu0 0
        %460 = vmatprep.subr.bf16.mxu0 0
        %461 = vmatpush1.bf16.msra.mxu0 0
        %462 = vmatprep.subr.bf16.mxu0 0
        %463 = vmatpush1.bf16.msra.mxu0 0
        %464 = vmatprep.subr.bf16.mxu0 0
        %465 = vmatpush1.bf16.msra.mxu0 0
        %466 = vmatprep.subr.bf16.mxu0 0
        %467 = vmatpush1.bf16.msra.mxu0 0
        %468 = vmatprep.subr.bf16.mxu0 0
        %469 = vmatpush1.bf16.msra.mxu0 0
        %470 = vmatprep.subr.bf16.mxu0 0
        %471 = vmatpush1.bf16.msra.mxu0 0
        %472 = vmatprep.subr.bf16.mxu0 0
        %473 = vmatpush1.bf16.msra.mxu0 0
        %474 = vmatprep.subr.bf16.mxu0 0
        %475 = vmatpush1.bf16.msra.mxu0 0
        %476 = vmatprep.subr.bf16.mxu0 0
        %477 = vmatpush1.bf16.msra.mxu0 0
        %478 = vmatprep.mubr.bf16.mxu0 0
        %479 = vmatmul.mubr.bf16.gmra.mrb[0].mxu0 %v444
        %v480 = vpop.f32.mrb[0].mxu0
        %v481 = vadd.f32 %v428, %v480
        %v482 = vpop.f32.mrb[0].mxu0
        %v483 = vpop.f32.mrb[0].mxu0
        %v484 = vpop.f32.mrb[0].mxu0
        %485 = vdwg.mxu0
        %v486 = vpack.c.bf16 %v481, %v481
        %vm487 = vcmask 257024
        %488 = vst.msk [vmem:[#allocation3] sm:$0xf] %vm487, %v486
        %v489 = vld [vmem:[#allocation3] sm:$0xf]
        %v490 = vld [vmem:[#allocation2] sm:$0xf]
        %vm491 = vcmask 64512
        %v493 = vsel %vm491, %v489, 0
        %v496 = vsel %vm491, %v490, 0
        %498 = vmatprep.subr.bf16.mxu0 0
        %499 = vmatpush1.bf16.xpose.msra.mxu0 %v496
        %500 = vmatprep.subr.bf16.mxu0 0
        %501 = vmatpush1.bf16.xpose.msra.mxu0 0
        %502 = vmatprep.subr.bf16.mxu0 0
        %503 = vmatpush1.bf16.xpose.msra.mxu0 0
        %504 = vmatprep.subr.bf16.mxu0 0
        %505 = vmatpush1.bf16.xpose.msra.mxu0 0
        %506 = vmatprep.subr.bf16.mxu0 0
        %507 = vmatpush1.bf16.xpose.msra.mxu0 0
        %508 = vmatprep.subr.bf16.mxu0 0
        %509 = vmatpush1.bf16.xpose.msra.mxu0 0
        %510 = vmatprep.subr.bf16.mxu0 0
        %511 = vmatpush1.bf16.xpose.msra.mxu0 0
        %512 = vmatprep.subr.bf16.mxu0 0
        %513 = vmatpush1.bf16.xpose.msra.mxu0 0
        %514 = vmatprep.subr.bf16.mxu0 0
        %515 = vmatpush1.bf16.xpose.msra.mxu0 0
        %516 = vmatprep.subr.bf16.mxu0 0
        %517 = vmatpush1.bf16.xpose.msra.mxu0 0
        %518 = vmatprep.subr.bf16.mxu0 0
        %519 = vmatpush1.bf16.xpose.msra.mxu0 0
        %520 = vmatprep.subr.bf16.mxu0 0
        %521 = vmatpush1.bf16.xpose.msra.mxu0 0
        %522 = vmatprep.subr.bf16.mxu0 0
        %523 = vmatpush1.bf16.xpose.msra.mxu0 0
        %524 = vmatprep.subr.bf16.mxu0 0
        %525 = vmatpush1.bf16.xpose.msra.mxu0 0
        %526 = vmatprep.subr.bf16.mxu0 0
        %527 = vmatpush1.bf16.xpose.msra.mxu0 0
        %528 = vmatprep.subr.bf16.mxu0 0
        %529 = vmatpush1.bf16.xpose.msra.mxu0 0
        %530 = vmatprep.mubr.bf16.mxu0 0
        %531 = vmatmul.mubr.bf16.gmra.mrb[0].mxu0 %v493
        %v532 = vpop.f32.mrb[0].mxu0
        %v533 = vadd.f32 0.0, %v532
        %v534 = vpop.f32.mrb[0].mxu0
        %v535 = vpop.f32.mrb[0].mxu0
        %v536 = vpop.f32.mrb[0].mxu0
        %537 = vdwg.mxu0
        %v538 = vsel %vm491, %v533, -inf
        %539 = vmax.xlane.f32.xlu0 %v538
        %v540 = vpop.xlane.xlu0 %539
        %v541 = vsub.f32 %v533, %v540
        %v542 = vmul.f32 %v541, 1.442695
        %v543 = vpow.pop %v542
        %v544 = vsel %vm491, %v543, 0.0
        %545 = vadd.xlane.f32.xlu0 %v544
        %v546 = vpop.xlane.xlu0 %545
        %v547 = vrcp.pop %v546
        %v548 = vpack.c.bf16 %v543, %v543
        %v550 = vunpack.c.l.b16 %v490
        %v551 = vpack.c.b16 %v550, %v550
        %552 = vrot.lane.b32.xlu0 %v551, 96
        %v553 = vpop.permute.xlu0 %552
        %v555 = vsel %vm491, %v548, 0
        %vm557 = vcmask 1043456
        %v559 = vsel %vm557, %v553, 0
        %561 = vmatprep.subr.bf16.mxu0 0
        %562 = vmatpush1.bf16.msra.mxu0 %v559
        %563 = vmatprep.subr.bf16.mxu0 0
        %564 = vmatpush1.bf16.msra.mxu0 0
        %565 = vmatprep.subr.bf16.mxu0 0
        %566 = vmatpush1.bf16.msra.mxu0 0
        %567 = vmatprep.subr.bf16.mxu0 0
        %568 = vmatpush1.bf16.msra.mxu0 0
        %569 = vmatprep.subr.bf16.mxu0 0
        %570 = vmatpush1.bf16.msra.mxu0 0
        %571 = vmatprep.subr.bf16.mxu0 0
        %572 = vmatpush1.bf16.msra.mxu0 0
        %573 = vmatprep.subr.bf16.mxu0 0
        %574 = vmatpush1.bf16.msra.mxu0 0
        %575 = vmatprep.subr.bf16.mxu0 0
        %576 = vmatpush1.bf16.msra.mxu0 0
        %577 = vmatprep.subr.bf16.mxu0 0
        %578 = vmatpush1.bf16.msra.mxu0 0
        %579 = vmatprep.subr.bf16.mxu0 0
        %580 = vmatpush1.bf16.msra.mxu0 0
        %581 = vmatprep.subr.bf16.mxu0 0
        %582 = vmatpush1.bf16.msra.mxu0 0
        %583 = vmatprep.subr.bf16.mxu0 0
        %584 = vmatpush1.bf16.msra.mxu0 0
        %585 = vmatprep.subr.bf16.mxu0 0
        %586 = vmatpush1.bf16.msra.mxu0 0
        %587 = vmatprep.subr.bf16.mxu0 0
        %588 = vmatpush1.bf16.msra.mxu0 0
        %589 = vmatprep.subr.bf16.mxu0 0
        %590 = vmatpush1.bf16.msra.mxu0 0
        %591 = vmatprep.subr.bf16.mxu0 0
        %592 = vmatpush1.bf16.msra.mxu0 0
        %593 = vmatprep.mubr.bf16.mxu0 0
        %594 = vmatmul.mubr.bf16.gmra.mrb[0].mxu0 %v555
        %v595 = vpop.f32.mrb[0].mxu0
        %v596 = vadd.f32 0.0, %v595
        %v597 = vpop.f32.mrb[0].mxu0
        %v598 = vpop.f32.mrb[0].mxu0
        %v599 = vpop.f32.mrb[0].mxu0
        %600 = vdwg.mxu0
        %v601 = vmul.f32 %v596, %v547
        %v602 = vpack.c.bf16 %v601, %v601
        %vm603 = vcmask 60416
        %604 = vst.msk [vmem:[#allocation4] sm:$0xf] %vm603, %v602
        %v605 = vld [vmem:[#allocation3] sm:$0xf]
        %v606 = vld [vmem:[#allocation2] sm:$0xf]
        %v608 = vunpack.c.l.b16 %v605
        %v609 = vpack.c.b16 %v608, %v608
        %610 = vrot.lane.b32.xlu0 %v609, 120
        %v611 = vpop.permute.xlu0 %610
        %v613 = vunpack.c.l.b16 %v606
        %v614 = vpack.c.b16 %v613, %v613
        %615 = vrot.lane.b32.xlu0 %v614, 120
        %v616 = vpop.permute.xlu0 %615
        %v618 = vsel %vm491, %v611, 0
        %v621 = vsel %vm491, %v616, 0
        %623 = vmatprep.subr.bf16.mxu0 0
        %624 = vmatpush1.bf16.xpose.msra.mxu0 %v621
        %625 = vmatprep.subr.bf16.mxu0 0
        %626 = vmatpush1.bf16.xpose.msra.mxu0 0
        %627 = vmatprep.subr.bf16.mxu0 0
        %628 = vmatpush1.bf16.xpose.msra.mxu0 0
        %629 = vmatprep.subr.bf16.mxu0 0
        %630 = vmatpush1.bf16.xpose.msra.mxu0 0
        %631 = vmatprep.subr.bf16.mxu0 0
        %632 = vmatpush1.bf16.xpose.msra.mxu0 0
        %633 = vmatprep.subr.bf16.mxu0 0
        %634 = vmatpush1.bf16.xpose.msra.mxu0 0
        %635 = vmatprep.subr.bf16.mxu0 0
        %636 = vmatpush1.bf16.xpose.msra.mxu0 0
        %637 = vmatprep.subr.bf16.mxu0 0
        %638 = vmatpush1.bf16.xpose.msra.mxu0 0
        %639 = vmatprep.subr.bf16.mxu0 0
        %640 = vmatpush1.bf16.xpose.msra.mxu0 0
        %641 = vmatprep.subr.bf16.mxu0 0
        %642 = vmatpush1.bf16.xpose.msra.mxu0 0
        %643 = vmatprep.subr.bf16.mxu0 0
        %644 = vmatpush1.bf16.xpose.msra.mxu0 0
        %645 = vmatprep.subr.bf16.mxu0 0
        %646 = vmatpush1.bf16.xpose.msra.mxu0 0
        %647 = vmatprep.subr.bf16.mxu0 0
        %648 = vmatpush1.bf16.xpose.msra.mxu0 0
        %649 = vmatprep.subr.bf16.mxu0 0
        %650 = vmatpush1.bf16.xpose.msra.mxu0 0
        %651 = vmatprep.subr.bf16.mxu0 0
        %652 = vmatpush1.bf16.xpose.msra.mxu0 0
        %653 = vmatprep.subr.bf16.mxu0 0
        %654 = vmatpush1.bf16.xpose.msra.mxu0 0
        %655 = vmatprep.mubr.bf16.mxu0 0
        %656 = vmatmul.mubr.bf16.gmra.mrb[0].mxu0 %v618
        %v657 = vpop.f32.mrb[0].mxu0
        %v658 = vadd.f32 0.0, %v657
        %v659 = vpop.f32.mrb[0].mxu0
        %v660 = vpop.f32.mrb[0].mxu0
        %v661 = vpop.f32.mrb[0].mxu0
        %662 = vdwg.mxu0
        %v663 = vsel %vm491, %v658, -inf
        %664 = vmax.xlane.f32.xlu0 %v663
        %v665 = vpop.xlane.xlu0 %664
        %v666 = vsub.f32 %v658, %v665
        %v667 = vmul.f32 %v666, 1.442695
        %v668 = vpow.pop %v667
        %v669 = vsel %vm491, %v668, 0.0
        %670 = vadd.xlane.f32.xlu0 %v669
        %v671 = vpop.xlane.xlu0 %670
        %v672 = vrcp.pop %v671
        %v673 = vpack.c.bf16 %v668, %v668
        %674 = vrot.lane.b32.xlu0 %v614, 88
        %v675 = vpop.permute.xlu0 %674
        %v677 = vsel %vm491, %v673, 0
        %v680 = vsel %vm557, %v675, 0
        %682 = vmatprep.subr.bf16.mxu0 0
        %683 = vmatpush1.bf16.msra.mxu0 %v680
        %684 = vmatprep.subr.bf16.mxu0 0
        %685 = vmatpush1.bf16.msra.mxu0 0
        %686 = vmatprep.subr.bf16.mxu0 0
        %687 = vmatpush1.bf16.msra.mxu0 0
        %688 = vmatprep.subr.bf16.mxu0 0
        %689 = vmatpush1.bf16.msra.mxu0 0
        %690 = vmatprep.subr.bf16.mxu0 0
        %691 = vmatpush1.bf16.msra.mxu0 0
        %692 = vmatprep.subr.bf16.mxu0 0
        %693 = vmatpush1.bf16.msra.mxu0 0
        %694 = vmatprep.subr.bf16.mxu0 0
        %695 = vmatpush1.bf16.msra.mxu0 0
        %696 = vmatprep.subr.bf16.mxu0 0
        %697 = vmatpush1.bf16.msra.mxu0 0
        %698 = vmatprep.subr.bf16.mxu0 0
        %699 = vmatpush1.bf16.msra.mxu0 0
        %700 = vmatprep.subr.bf16.mxu0 0
        %701 = vmatpush1.bf16.msra.mxu0 0
        %702 = vmatprep.subr.bf16.mxu0 0
        %703 = vmatpush1.bf16.msra.mxu0 0
        %704 = vmatprep.subr.bf16.mxu0 0
        %705 = vmatpush1.bf16.msra.mxu0 0
        %706 = vmatprep.subr.bf16.mxu0 0
        %707 = vmatpush1.bf16.msra.mxu0 0
        %708 = vmatprep.subr.bf16.mxu0 0
        %709 = vmatpush1.bf16.msra.mxu0 0
        %710 = vmatprep.subr.bf16.mxu0 0
        %711 = vmatpush1.bf16.msra.mxu0 0
        %712 = vmatprep.subr.bf16.mxu0 0
        %713 = vmatpush1.bf16.msra.mxu0 0
        %714 = vmatprep.mubr.bf16.mxu0 0
        %715 = vmatmul.mubr.bf16.gmra.mrb[0].mxu0 %v677
        %v716 = vpop.f32.mrb[0].mxu0
        %v717 = vadd.f32 0.0, %v716
        %v718 = vpop.f32.mrb[0].mxu0
        %v719 = vpop.f32.mrb[0].mxu0
        %v720 = vpop.f32.mrb[0].mxu0
        %721 = vdwg.mxu0
        %v722 = vmul.f32 %v717, %v672
        %v723 = vpack.c.bf16 %v722, %v722
        %v725 = vunpack.c.l.b16 %v723
        %v726 = vpack.c.b16 %v725, %v725
        %727 = vrot.lane.b32.xlu0 %v726, 8
        %v728 = vpop.permute.xlu0 %727
        %vm730 = vcmask 126016
        %731 = vst.msk [vmem:[#allocation4] sm:$0xf] %vm730, %v728
        %v732 = vld [vmem:[#allocation3] sm:$0xf]
        %v733 = vld [vmem:[#allocation2] sm:$0xf]
        %v735 = vunpack.c.l.b16 %v732
        %v736 = vpack.c.b16 %v735, %v735
        %737 = vrot.lane.b32.xlu0 %v736, 112
        %v738 = vpop.permute.xlu0 %737
        %v740 = vunpack.c.l.b16 %v733
        %v741 = vpack.c.b16 %v740, %v740
        %742 = vrot.lane.b32.xlu0 %v741, 112
        %v743 = vpop.permute.xlu0 %742
        %v745 = vsel %vm491, %v738, 0
        %v748 = vsel %vm491, %v743, 0
        %750 = vmatprep.subr.bf16.mxu0 0
        %751 = vmatpush1.bf16.xpose.msra.mxu0 %v748
        %752 = vmatprep.subr.bf16.mxu0 0
        %753 = vmatpush1.bf16.xpose.msra.mxu0 0
        %754 = vmatprep.subr.bf16.mxu0 0
        %755 = vmatpush1.bf16.xpose.msra.mxu0 0
        %756 = vmatprep.subr.bf16.mxu0 0
        %757 = vmatpush1.bf16.xpose.msra.mxu0 0
        %758 = vmatprep.subr.bf16.mxu0 0
        %759 = vmatpush1.bf16.xpose.msra.mxu0 0
        %760 = vmatprep.subr.bf16.mxu0 0
        %761 = vmatpush1.bf16.xpose.msra.mxu0 0
        %762 = vmatprep.subr.bf16.mxu0 0
        %763 = vmatpush1.bf16.xpose.msra.mxu0 0
        %764 = vmatprep.subr.bf16.mxu0 0
        %765 = vmatpush1.bf16.xpose.msra.mxu0 0
        %766 = vmatprep.subr.bf16.mxu0 0
        %767 = vmatpush1.bf16.xpose.msra.mxu0 0
        %768 = vmatprep.subr.bf16.mxu0 0
        %769 = vmatpush1.bf16.xpose.msra.mxu0 0
        %770 = vmatprep.subr.bf16.mxu0 0
        %771 = vmatpush1.bf16.xpose.msra.mxu0 0
        %772 = vmatprep.subr.bf16.mxu0 0
        %773 = vmatpush1.bf16.xpose.msra.mxu0 0
        %774 = vmatprep.subr.bf16.mxu0 0
        %775 = vmatpush1.bf16.xpose.msra.mxu0 0
        %776 = vmatprep.subr.bf16.mxu0 0
        %777 = vmatpush1.bf16.xpose.msra.mxu0 0
        %778 = vmatprep.subr.bf16.mxu0 0
        %779 = vmatpush1.bf16.xpose.msra.mxu0 0
        %780 = vmatprep.subr.bf16.mxu0 0
        %781 = vmatpush1.bf16.xpose.msra.mxu0 0
        %782 = vmatprep.mubr.bf16.mxu0 0
        %783 = vmatmul.mubr.bf16.gmra.mrb[0].mxu0 %v745
        %v784 = vpop.f32.mrb[0].mxu0
        %v785 = vadd.f32 0.0, %v784
        %v786 = vpop.f32.mrb[0].mxu0
        %v787 = vpop.f32.mrb[0].mxu0
        %v788 = vpop.f32.mrb[0].mxu0
        %789 = vdwg.mxu0
        %v790 = vsel %vm491, %v785, -inf
        %791 = vmax.xlane.f32.xlu0 %v790
        %v792 = vpop.xlane.xlu0 %791
        %v793 = vsub.f32 %v785, %v792
        %v794 = vmul.f32 %v793, 1.442695
        %v795 = vpow.pop %v794
        %v796 = vsel %vm491, %v795, 0.0
        %797 = vadd.xlane.f32.xlu0 %v796
        %v798 = vpop.xlane.xlu0 %797
        %v799 = vrcp.pop %v798
        %v800 = vpack.c.bf16 %v795, %v795
        %801 = vrot.lane.b32.xlu0 %v741, 80
        %v802 = vpop.permute.xlu0 %801
        %v804 = vsel %vm491, %v800, 0
        %v807 = vsel %vm557, %v802, 0
        %809 = vmatprep.subr.bf16.mxu0 0
        %810 = vmatpush1.bf16.msra.mxu0 %v807
        %811 = vmatprep.subr.bf16.mxu0 0
        %812 = vmatpush1.bf16.msra.mxu0 0
        %813 = vmatprep.subr.bf16.mxu0 0
        %814 = vmatpush1.bf16.msra.mxu0 0
        %815 = vmatprep.subr.bf16.mxu0 0
        %816 = vmatpush1.bf16.msra.mxu0 0
        %817 = vmatprep.subr.bf16.mxu0 0
        %818 = vmatpush1.bf16.msra.mxu0 0
        %819 = vmatprep.subr.bf16.mxu0 0
        %820 = vmatpush1.bf16.msra.mxu0 0
        %821 = vmatprep.subr.bf16.mxu0 0
        %822 = vmatpush1.bf16.msra.mxu0 0
        %823 = vmatprep.subr.bf16.mxu0 0
        %824 = vmatpush1.bf16.msra.mxu0 0
        %825 = vmatprep.subr.bf16.mxu0 0
        %826 = vmatpush1.bf16.msra.mxu0 0
        %827 = vmatprep.subr.bf16.mxu0 0
        %828 = vmatpush1.bf16.msra.mxu0 0
        %829 = vmatprep.subr.bf16.mxu0 0
        %830 = vmatpush1.bf16.msra.mxu0 0
        %831 = vmatprep.subr.bf16.mxu0 0
        %832 = vmatpush1.bf16.msra.mxu0 0
        %833 = vmatprep.subr.bf16.mxu0 0
        %834 = vmatpush1.bf16.msra.mxu0 0
        %835 = vmatprep.subr.bf16.mxu0 0
        %836 = vmatpush1.bf16.msra.mxu0 0
        %837 = vmatprep.subr.bf16.mxu0 0
        %838 = vmatpush1.bf16.msra.mxu0 0
        %839 = vmatprep.subr.bf16.mxu0 0
        %840 = vmatpush1.bf16.msra.mxu0 0
        %841 = vmatprep.mubr.bf16.mxu0 0
        %842 = vmatmul.mubr.bf16.gmra.mrb[0].mxu0 %v804
        %v843 = vpop.f32.mrb[0].mxu0
        %v844 = vadd.f32 0.0, %v843
        %v845 = vpop.f32.mrb[0].mxu0
        %v846 = vpop.f32.mrb[0].mxu0
        %v847 = vpop.f32.mrb[0].mxu0
        %848 = vdwg.mxu0
        %v849 = vmul.f32 %v844, %v799
        %v850 = vpack.c.bf16 %v849, %v849
        %v852 = vunpack.c.l.b16 %v850
        %v853 = vpack.c.b16 %v852, %v852
        %854 = vrot.lane.b32.xlu0 %v853, 16
        %v855 = vpop.permute.xlu0 %854
        %vm857 = vcmask 191616
        %858 = vst.msk [vmem:[#allocation4] sm:$0xf] %vm857, %v855
        %v859 = vld [vmem:[#allocation3] sm:$0xf]
        %v860 = vld [vmem:[#allocation2] sm:$0xf]
        %v862 = vunpack.c.l.b16 %v859
        %v863 = vpack.c.b16 %v862, %v862
        %864 = vrot.lane.b32.xlu0 %v863, 104
        %v865 = vpop.permute.xlu0 %864
        %v867 = vunpack.c.l.b16 %v860
        %v868 = vpack.c.b16 %v867, %v867
        %869 = vrot.lane.b32.xlu0 %v868, 104
        %v870 = vpop.permute.xlu0 %869
        %v872 = vsel %vm491, %v865, 0
        %v875 = vsel %vm491, %v870, 0
        %877 = vmatprep.subr.bf16.mxu0 0
        %878 = vmatpush1.bf16.xpose.msra.mxu0 %v875
        %879 = vmatprep.subr.bf16.mxu0 0
        %880 = vmatpush1.bf16.xpose.msra.mxu0 0
        %881 = vmatprep.subr.bf16.mxu0 0
        %882 = vmatpush1.bf16.xpose.msra.mxu0 0
        %883 = vmatprep.subr.bf16.mxu0 0
        %884 = vmatpush1.bf16.xpose.msra.mxu0 0
        %885 = vmatprep.subr.bf16.mxu0 0
        %886 = vmatpush1.bf16.xpose.msra.mxu0 0
        %887 = vmatprep.subr.bf16.mxu0 0
        %888 = vmatpush1.bf16.xpose.msra.mxu0 0
        %889 = vmatprep.subr.bf16.mxu0 0
        %890 = vmatpush1.bf16.xpose.msra.mxu0 0
        %891 = vmatprep.subr.bf16.mxu0 0
        %892 = vmatpush1.bf16.xpose.msra.mxu0 0
        %893 = vmatprep.subr.bf16.mxu0 0
        %894 = vmatpush1.bf16.xpose.msra.mxu0 0
        %895 = vmatprep.subr.bf16.mxu0 0
        %896 = vmatpush1.bf16.xpose.msra.mxu0 0
        %897 = vmatprep.subr.bf16.mxu0 0
        %898 = vmatpush1.bf16.xpose.msra.mxu0 0
        %899 = vmatprep.subr.bf16.mxu0 0
        %900 = vmatpush1.bf16.xpose.msra.mxu0 0
        %901 = vmatprep.subr.bf16.mxu0 0
        %902 = vmatpush1.bf16.xpose.msra.mxu0 0
        %903 = vmatprep.subr.bf16.mxu0 0
        %904 = vmatpush1.bf16.xpose.msra.mxu0 0
        %905 = vmatprep.subr.bf16.mxu0 0
        %906 = vmatpush1.bf16.xpose.msra.mxu0 0
        %907 = vmatprep.subr.bf16.mxu0 0
        %908 = vmatpush1.bf16.xpose.msra.mxu0 0
        %909 = vmatprep.mubr.bf16.mxu0 0
        %910 = vmatmul.mubr.bf16.gmra.mrb[0].mxu0 %v872
        %v911 = vpop.f32.mrb[0].mxu0
        %v912 = vadd.f32 0.0, %v911
        %v913 = vpop.f32.mrb[0].mxu0
        %v914 = vpop.f32.mrb[0].mxu0
        %v915 = vpop.f32.mrb[0].mxu0
        %916 = vdwg.mxu0
        %v917 = vsel %vm491, %v912, -inf
        %918 = vmax.xlane.f32.xlu0 %v917
        %v919 = vpop.xlane.xlu0 %918
        %v920 = vsub.f32 %v912, %v919
        %v921 = vmul.f32 %v920, 1.442695
        %v922 = vpow.pop %v921
        %v923 = vsel %vm491, %v922, 0.0
        %924 = vadd.xlane.f32.xlu0 %v923
        %v925 = vpop.xlane.xlu0 %924
        %v926 = vrcp.pop %v925
        %v927 = vpack.c.bf16 %v922, %v922
        %928 = vrot.lane.b32.xlu0 %v868, 72
        %v929 = vpop.permute.xlu0 %928
        %v931 = vsel %vm491, %v927, 0
        %v934 = vsel %vm557, %v929, 0
        %936 = vmatprep.subr.bf16.mxu0 0
        %937 = vmatpush1.bf16.msra.mxu0 %v934
        %938 = vmatprep.subr.bf16.mxu0 0
        %939 = vmatpush1.bf16.msra.mxu0 0
        %940 = vmatprep.subr.bf16.mxu0 0
        %941 = vmatpush1.bf16.msra.mxu0 0
        %942 = vmatprep.subr.bf16.mxu0 0
        %943 = vmatpush1.bf16.msra.mxu0 0
        %944 = vmatprep.subr.bf16.mxu0 0
        %945 = vmatpush1.bf16.msra.mxu0 0
        %946 = vmatprep.subr.bf16.mxu0 0
        %947 = vmatpush1.bf16.msra.mxu0 0
        %948 = vmatprep.subr.bf16.mxu0 0
        %949 = vmatpush1.bf16.msra.mxu0 0
        %950 = vmatprep.subr.bf16.mxu0 0
        %951 = vmatpush1.bf16.msra.mxu0 0
        %952 = vmatprep.subr.bf16.mxu0 0
        %953 = vmatpush1.bf16.msra.mxu0 0
        %954 = vmatprep.subr.bf16.mxu0 0
        %955 = vmatpush1.bf16.msra.mxu0 0
        %956 = vmatprep.subr.bf16.mxu0 0
        %957 = vmatpush1.bf16.msra.mxu0 0
        %958 = vmatprep.subr.bf16.mxu0 0
        %959 = vmatpush1.bf16.msra.mxu0 0
        %960 = vmatprep.subr.bf16.mxu0 0
        %961 = vmatpush1.bf16.msra.mxu0 0
        %962 = vmatprep.subr.bf16.mxu0 0
        %963 = vmatpush1.bf16.msra.mxu0 0
        %964 = vmatprep.subr.bf16.mxu0 0
        %965 = vmatpush1.bf16.msra.mxu0 0
        %966 = vmatprep.subr.bf16.mxu0 0
        %967 = vmatpush1.bf16.msra.mxu0 0
        %968 = vmatprep.mubr.bf16.mxu0 0
        %969 = vmatmul.mubr.bf16.gmra.mrb[0].mxu0 %v931
        %v970 = vpop.f32.mrb[0].mxu0
        %v971 = vadd.f32 0.0, %v970
        %v972 = vpop.f32.mrb[0].mxu0
        %v973 = vpop.f32.mrb[0].mxu0
        %v974 = vpop.f32.mrb[0].mxu0
        %975 = vdwg.mxu0
        %v976 = vmul.f32 %v971, %v926
        %v977 = vpack.c.bf16 %v976, %v976
        %v979 = vunpack.c.l.b16 %v977
        %v980 = vpack.c.b16 %v979, %v979
        %981 = vrot.lane.b32.xlu0 %v980, 24
        %v982 = vpop.permute.xlu0 %981
        %vm984 = vcmask 257216
        %985 = vst.msk [vmem:[#allocation4] sm:$0xf] %vm984, %v982
        %v986 = vld [vmem:[#allocation4] sm:$0xf]
        %v987 = vld [vmem:[%s5] sm:$0xf]
        %v988 = vld [vmem:[%s5 + $0x4] sm:$0xf]
        %v989 = vld [vmem:[%s5 + $0x8] sm:$0xf]
        %v990 = vld [vmem:[%s5 + $0xc] sm:$0xf]
        %v991 = vld [vmem:[%s6] sm:$0x1]
        %v993 = vlaneseq
        %v994 = vshrl.u32 %v993, 7
        %v995 = vsub.s32 0, %v994
        %v996 = vrot.slane %v991, %v995
        %v1002 = vunpack.c.l.b16 %v987
        %v1003 = vunpack.c.l.b16 %v988
        %v1004 = vunpack.c.l.b16 %v989
        %v1005 = vunpack.c.l.b16 %v990
        %v1006 = vpack.c.b16 %v1003, %v1002
        %v1007 = vpack.c.b16 %v1005, %v1004
        %v1011 = vsel %vm442, %v986, 0
        %1013 = vmatprep.subr.bf16.mxu0 0
        %1014 = vmatpush1.bf16.msra.mxu0 %v1006
        %1015 = vmatprep.subr.bf16.mxu0 0
        %1016 = vmatpush1.bf16.msra.mxu0 %v1007
        %1017 = vmatprep.subr.bf16.mxu0 0
        %1018 = vmatpush1.bf16.msra.mxu0 0
        %1019 = vmatprep.subr.bf16.mxu0 0
        %1020 = vmatpush1.bf16.msra.mxu0 0
        %1021 = vmatprep.subr.bf16.mxu0 0
        %1022 = vmatpush1.bf16.msra.mxu0 0
        %1023 = vmatprep.subr.bf16.mxu0 0
        %1024 = vmatpush1.bf16.msra.mxu0 0
        %1025 = vmatprep.subr.bf16.mxu0 0
        %1026 = vmatpush1.bf16.msra.mxu0 0
        %1027 = vmatprep.subr.bf16.mxu0 0
        %1028 = vmatpush1.bf16.msra.mxu0 0
        %1029 = vmatprep.subr.bf16.mxu0 0
        %1030 = vmatpush1.bf16.msra.mxu0 0
        %1031 = vmatprep.subr.bf16.mxu0 0
        %1032 = vmatpush1.bf16.msra.mxu0 0
        %1033 = vmatprep.subr.bf16.mxu0 0
        %1034 = vmatpush1.bf16.msra.mxu0 0
        %1035 = vmatprep.subr.bf16.mxu0 0
        %1036 = vmatpush1.bf16.msra.mxu0 0
        %1037 = vmatprep.subr.bf16.mxu0 0
        %1038 = vmatpush1.bf16.msra.mxu0 0
        %1039 = vmatprep.subr.bf16.mxu0 0
        %1040 = vmatpush1.bf16.msra.mxu0 0
        %1041 = vmatprep.subr.bf16.mxu0 0
        %1042 = vmatpush1.bf16.msra.mxu0 0
        %1043 = vmatprep.subr.bf16.mxu0 0
        %1044 = vmatpush1.bf16.msra.mxu0 0
        %1045 = vmatprep.mubr.bf16.mxu0 0
        %1046 = vmatmul.mubr.bf16.gmra.mrb[0].mxu0 %v1011
        %v1047 = vpop.f32.mrb[0].mxu0
        %v1048 = vadd.f32 %v996, %v1047
        %v1049 = vpop.f32.mrb[0].mxu0
        %v1050 = vpop.f32.mrb[0].mxu0
        %v1051 = vpop.f32.mrb[0].mxu0
        %1052 = vdwg.mxu0
        %1053 = vst.msk [vmem:[%s336] sm:$0xff] %vm442, %v1048
        %s1054 = sand.u32 %s199, 1
        %s1055 = scalar_lea.sflag [#allocation7], %s1054
        %s1056 = sand.u32 %s199, 1
        %s1057 = smul.addr %s1056, 8
        %s1058 = scalar_lea.vmem [#allocation11], %s1057
        // Predicated region
        $region65: #{tpu_custom_call.1} parent=47 // pred_check
          %p1059 = pneg %p209
        $region66: #{tpu_custom_call.1} parent=47 // pred_check_branch
          %1061 = sbr.rel (%p1059) target = $region68
        $region67: #{tpu_custom_call.1} parent=47 // pred_region
          %s1063 = ssub.s32 128, 128
          %1064 = vsyncadd %s1055, %s1063
          %s1065 = sadd.s32 %s30, %s29
          %s1066 = smul.addr %s1065, 128
          %s1067 = scalar_lea.hbm %s7, %s1066
          %s1069 = sshll.u32 %s1058, 4
          %s1070 = int_to_ptr.vmem [resolvable:$true] %s1069
          %1072 = dma.vmem_to_hbm [thread:$0]  %s1070, 128, %s1067, %s1055
        $region68: #{tpu_custom_call.1} parent=47 // pred_fallthru
          _
      $region48: #{tpu_custom_call.1} parent=5 // pred_fallthru
        _
      %p1073 = scmp.le.s32.totalorder 2, %s20
      // Predicated region
      $region69: #{tpu_custom_call.1} parent=5 // pred_check
        %p1074 = pneg %p1073
      $region70: #{tpu_custom_call.1} parent=5 // pred_check_branch
        %1076 = sbr.rel (%p1074) target = $region72
      $region71: #{tpu_custom_call.1} parent=5 // pred_region
        %s1077 = ssub.s32 %s20, 2
        // Predicated region
        $region73: #{tpu_custom_call.1} parent=71 // pred_check
          %p1078 = pneg %p215
        $region74: #{tpu_custom_call.1} parent=71 // pred_check_branch
          %1080 = sbr.rel (%p1078) target = $region76
        $region75: #{tpu_custom_call.1} parent=71 // pred_region
          %s1081 = sand.u32 %s200, 1
          %s1082 = scalar_lea.sflag [#allocation7], %s1081
          %s1083 = sand.u32 %s200, 1
          %s1084 = smul.addr %s1083, 8
          %s1085 = scalar_lea.vmem [#allocation11], %s1084
          %1086 = dma.done %s1082, 128
        $region76: #{tpu_custom_call.1} parent=71 // pred_fallthru
          _
      $region72: #{tpu_custom_call.1} parent=5 // pred_fallthru
        _
    $region6: #{tpu_custom_call.1} parent=1 // loop_footer
      %s24 = sadd.s32 1, %s20
    $region7: #{tpu_custom_call.1} parent=1 // loop_footer_branch
      %19 = sbr.rel target = $region3
    $region8: #{tpu_custom_call.1} parent=1 // loop_exit
      _
    %1087 = vsyncpa [#allocation6], 1
    %s1088 = scalar_lea.sflag [#allocation6], 1
    %1089 = vsyncpa %s1088, 1
    %1090 = vsyncpa [#allocation9], 1
    %1091 = vsyncpa [#allocation7], 1
    %s1092 = scalar_lea.sflag [#allocation7], 1
    %1093 = vsyncpa %s1092, 1

// kernel: tpu_custom_call.1
$region0: #{tpu_custom_call.1}
  #allocation0 [shape = 'u32[]', space=smem, size = 0x4, offset = 0x4, fixed_abs, tag = 'smem constant byte address 0x4 - core index']
  #allocation1 [shape = 'u32[144,128]{1,0:T(1,128)}', space=vmem, size = 0x12000, scoped, tag = 'internal scratch']
  #allocation2 [shape = 'bf16[8,64]{1,0:T(8,128)(2,1)}', space=vmem, size = 0x800, scoped, tag = 'scratch operand']
  #allocation3 [shape = 'bf16[8,32]{1,0:T(8,128)(2,1)}', space=vmem, size = 0x800, scoped, tag = 'scratch operand']
  #allocation4 [shape = 'bf16[8,32]{1,0:T(8,128)(2,1)}', space=vmem, size = 0x800, scoped, tag = 'scratch operand']
  %s0 = inlined_call_operand.hbm [shape: bf16[2,8,32], index: 0, kind: input, shape index: {}]
  %s1 = inlined_call_operand.hbm [shape: bf16[32,32], index: 1, kind: input, shape index: {}]
  %s2 = inlined_call_operand.vmem [shape: f32[1,32], index: 2, kind: input, shape index: {}]
  %s3 = inlined_call_operand.hbm [shape: bf16[32,64], index: 3, kind: input, shape index: {}]
  %s4 = inlined_call_operand.vmem [shape: f32[1,64], index: 4, kind: input, shape index: {}]
  %s5 = inlined_call_operand.vmem [shape: bf16[32,32], index: 5, kind: input, shape index: {}]
  %s6 = inlined_call_operand.vmem [shape: f32[1,32], index: 6, kind: input, shape index: {}]
  %s7 = inlined_call_operand.hbm [shape: f32[2,8,32], index: 7, kind: output, shape index: {}]
  %s8 = sld [smem:[#allocation0]]
  $region77: #{tpu_custom_call.1} parent=0
    _
  %s10 = ssub.s32 1, %s8
  %s11 = scalar_select 0, %s10, %s8
  $region1: #{tpu_custom_call.1} parent=0
    #allocation5 [shape = 'u8[4096]{0}', space=vmem, size = 0x1000, scoped, tag = 'input window, operand 0']
    #allocation6 [shape = 's32[2]{0}', space=sflag, size = 0x8, scoped, tag = 'scoped memory for tpu_custom_call.1']
    #allocation7 [shape = 's32[2]{0}', space=sflag, size = 0x8, scoped, tag = 'scoped memory for tpu_custom_call.1']
    #allocation8 [shape = 'u8[8192]{0}', space=vmem, size = 0x2000, scoped, tag = 'input window, operand 1, single buffered']
    #allocation9 [shape = 's32[1]{0}', space=sflag, size = 0x4, scoped, tag = 'scoped memory for tpu_custom_call.1']
    #allocation10 [shape = 'u8[8192]{0}', space=vmem, size = 0x2000, scoped, tag = 'input window, operand 3, single buffered']
    #allocation11 [shape = 'u8[8192]{0}', space=vmem, size = 0x2000, scoped, tag = 'output window, operand 0']
    %12 = vsyncpa [#allocation6], 0
    %s13 = scalar_lea.sflag [#allocation6], 1
    %14 = vsyncpa %s13, 0
    %15 = vsyncpa [#allocation9], 0
    %16 = vsyncpa [#allocation7], 0
    %s17 = scalar_lea.sflag [#allocation7], 1
    %18 = vsyncpa %s17, 0
    loop: start=0, step=1, limit=4
    $region2: #{tpu_custom_call.1} parent=1 // loop_pre_header
      _
    $region3: #{tpu_custom_call.1} parent=1 // loop_header
      %s20 = sphi 0, %s24
      %p21 = scmp.ge.s32.totalorder %s20, 4
      %s27 = sphi 0, %s39
      %s28 = sphi 0, %s35
      %s29 = sphi 0, %s27
      %s30 = sphi 0, %s28
      %s31 = sphi 0, %s29
      %s32 = sphi 0, %s30
      %s42 = sphi 0, %s44
      %s45 = sphi 0, %s42
      %s46 = sphi 0, %s45
      %s62 = sphi 0, %s46
      %s66 = sphi 0, %s66
      %s68 = sphi 0, %s66
      %s69 = sphi 0, %s68
      %s83 = sphi 0, %s69
      %s87 = sphi 0, %s87
      %s89 = sphi 0, %s87
      %s90 = sphi 0, %s89
      %s104 = sphi 0, %s90
      %s108 = sphi 0, %s108
      %s110 = sphi 0, %s108
      %s111 = sphi 0, %s110
      %s125 = sphi 0, %s111
      %s129 = sphi 0, %s129
      %s131 = sphi 0, %s129
      %s132 = sphi 0, %s131
      %s146 = sphi 0, %s132
      %s150 = sphi 0, %s150
      %s152 = sphi 0, %s150
      %s153 = sphi 0, %s152
      %s167 = sphi 0, %s153
      %s171 = sphi 0, %s171
      %s173 = sphi 0, %s171
      %s174 = sphi 0, %s173
      %s188 = sphi 0, %s174
      %s196 = sphi 0, %s198
      %s199 = sphi 0, %s196
      %s200 = sphi 0, %s199
      %s216 = sphi 0, %s200
    $region4: #{tpu_custom_call.1} parent=1 // loop_header_branch
      %23 = sbr.rel (%p21) target = $region8
    $region5: #{tpu_custom_call.1} parent=1 // loop_body
      %s25 = ssub.s32 %s20, 1
      %s26 = ssub.s32 %s20, 2
      %s33 = sadd.s32 1, %s28
      %p34 = scmp.ge.s32.totalorder %s33, 1
      %s35 = scalar_select %p34, 0, %s33
      %s36 = sadd.s32 1, %s27
      %s37 = scalar_select %p34, %s36, %s27
      %p38 = scmp.ge.s32.totalorder %s37, 2
      %s39 = scalar_select %p38, 0, %s37
      %s40 = ssub.s32 %s27, %s39
      %p41 = scmp.eq.s32.totalorder %s40, 0
      %s43 = sadd.s32 %s42, 1
      %s44 = scalar_select %p41, %s42, %s43
      %p47 = pneg %p41
      %p48 = scmp.eq.s32.totalorder %s20, 1
      %p49 = por %p47, %p48
      %p50 = scmp.ne.s32.totalorder %s42, %s45
      %p51 = scmp.eq.s32.totalorder %s20, 0
      %p52 = por %p50, %p51
      %p53 = scmp.ne.s32.totalorder %s42, %s45
      %p54 = scmp.eq.s32.totalorder %s25, 1
      %p55 = por %p53, %p54
      %p56 = scmp.ne.s32.totalorder %s45, %s46
      %p57 = scmp.eq.s32.totalorder %s25, 0
      %p58 = por %p56, %p57
      %p59 = scmp.ne.s32.totalorder %s45, %s46
      %p60 = scmp.eq.s32.totalorder %s26, 1
      %p61 = por %p59, %p60
      %p63 = scmp.ne.s32.totalorder %s46, %s62
      %p64 = scmp.eq.s32.totalorder %s26, 0
      %p65 = por %p63, %p64
      %s67 = sadd.s32 %s66, 1
      %p70 = scmp.eq.s32.totalorder %s20, 1
      %p71 = scmp.ne.s32.totalorder %s66, %s68
      %p72 = scmp.eq.s32.totalorder %s20, 0
      %p73 = por %p71, %p72
      %p74 = scmp.ne.s32.totalorder %s66, %s68
      %p75 = scmp.eq.s32.totalorder %s25, 1
      %p76 = por %p74, %p75
      %p77 = scmp.ne.s32.totalorder %s68, %s69
      %p78 = scmp.eq.s32.totalorder %s25, 0
      %p79 = por %p77, %p78
      %p80 = scmp.ne.s32.totalorder %s68, %s69
      %p81 = scmp.eq.s32.totalorder %s26, 1
      %p82 = por %p80, %p81
      %p84 = scmp.ne.s32.totalorder %s69, %s83
      %p85 = scmp.eq.s32.totalorder %s26, 0
      %p86 = por %p84, %p85
      %s88 = sadd.s32 %s87, 1
      %p91 = scmp.eq.s32.totalorder %s20, 1
      %p92 = scmp.ne.s32.totalorder %s87, %s89
      %p93 = scmp.eq.s32.totalorder %s20, 0
      %p94 = por %p92, %p93
      %p95 = scmp.ne.s32.totalorder %s87, %s89
      %p96 = scmp.eq.s32.totalorder %s25, 1
      %p97 = por %p95, %p96
      %p98 = scmp.ne.s32.totalorder %s89, %s90
      %p99 = scmp.eq.s32.totalorder %s25, 0
      %p100 = por %p98, %p99
      %p101 = scmp.ne.s32.totalorder %s89, %s90
      %p102 = scmp.eq.s32.totalorder %s26, 1
      %p103 = por %p101, %p102
      %p105 = scmp.ne.s32.totalorder %s90, %s104
      %p106 = scmp.eq.s32.totalorder %s26, 0
      %p107 = por %p105, %p106
      %s109 = sadd.s32 %s108, 1
      %p112 = scmp.eq.s32.totalorder %s20, 1
      %p113 = scmp.ne.s32.totalorder %s108, %s110
      %p114 = scmp.eq.s32.totalorder %s20, 0
      %p115 = por %p113, %p114
      %p116 = scmp.ne.s32.totalorder %s108, %s110
      %p117 = scmp.eq.s32.totalorder %s25, 1
      %p118 = por %p116, %p117
      %p119 = scmp.ne.s32.totalorder %s110, %s111
      %p120 = scmp.eq.s32.totalorder %s25, 0
      %p121 = por %p119, %p120
      %p122 = scmp.ne.s32.totalorder %s110, %s111
      %p123 = scmp.eq.s32.totalorder %s26, 1
      %p124 = por %p122, %p123
      %p126 = scmp.ne.s32.totalorder %s111, %s125
      %p127 = scmp.eq.s32.totalorder %s26, 0
      %p128 = por %p126, %p127
      %s130 = sadd.s32 %s129, 1
      %p133 = scmp.eq.s32.totalorder %s20, 1
      %p134 = scmp.ne.s32.totalorder %s129, %s131
      %p135 = scmp.eq.s32.totalorder %s20, 0
      %p136 = por %p134, %p135
      %p137 = scmp.ne.s32.totalorder %s129, %s131
      %p138 = scmp.eq.s32.totalorder %s25, 1
      %p139 = por %p137, %p138
      %p140 = scmp.ne.s32.totalorder %s131, %s132
      %p141 = scmp.eq.s32.totalorder %s25, 0
      %p142 = por %p140, %p141
      %p143 = scmp.ne.s32.totalorder %s131, %s132
      %p144 = scmp.eq.s32.totalorder %s26, 1
      %p145 = por %p143, %p144
      %p147 = scmp.ne.s32.totalorder %s132, %s146
      %p148 = scmp.eq.s32.totalorder %s26, 0
      %p149 = por %p147, %p148
      %s151 = sadd.s32 %s150, 1
      %p154 = scmp.eq.s32.totalorder %s20, 1
      %p155 = scmp.ne.s32.totalorder %s150, %s152
      %p156 = scmp.eq.s32.totalorder %s20, 0
      %p157 = por %p155, %p156
      %p158 = scmp.ne.s32.totalorder %s150, %s152
      %p159 = scmp.eq.s32.totalorder %s25, 1
      %p160 = por %p158, %p159
      %p161 = scmp.ne.s32.totalorder %s152, %s153
      %p162 = scmp.eq.s32.totalorder %s25, 0
      %p163 = por %p161, %p162
      %p164 = scmp.ne.s32.totalorder %s152, %s153
      %p165 = scmp.eq.s32.totalorder %s26, 1
      %p166 = por %p164, %p165
      %p168 = scmp.ne.s32.totalorder %s153, %s167
      %p169 = scmp.eq.s32.totalorder %s26, 0
      %p170 = por %p168, %p169
      %s172 = sadd.s32 %s171, 1
      %p175 = scmp.eq.s32.totalorder %s20, 1
      %p176 = scmp.ne.s32.totalorder %s171, %s173
      %p177 = scmp.eq.s32.totalorder %s20, 0
      %p178 = por %p176, %p177
      %p179 = scmp.ne.s32.totalorder %s171, %s173
      %p180 = scmp.eq.s32.totalorder %s25, 1
      %p181 = por %p179, %p180
      %p182 = scmp.ne.s32.totalorder %s173, %s174
      %p183 = scmp.eq.s32.totalorder %s25, 0
      %p184 = por %p182, %p183
      %p185 = scmp.ne.s32.totalorder %s173, %s174
      %p186 = scmp.eq.s32.totalorder %s26, 1
      %p187 = por %p185, %p186
      %p189 = scmp.ne.s32.totalorder %s174, %s188
      %p190 = scmp.eq.s32.totalorder %s26, 0
      %p191 = por %p189, %p190
      %s192 = ssub.s32 %s27, %s39
      %s193 = ssub.s32 %s28, %s35
      %s194 = sor.u32 %s192, %s193
      %p195 = scmp.eq.s32.totalorder %s194, 0
      %s197 = sadd.s32 %s196, 1
      %s198 = scalar_select %p195, %s196, %s197
      %p201 = pneg %p195
      %p202 = scmp.eq.s32.totalorder %s20, 1
      %p203 = por %p201, %p202
      %p204 = scmp.ne.s32.totalorder %s196, %s199
      %p205 = scmp.eq.s32.totalorder %s20, 0
      %p206 = por %p204, %p205
      %p207 = scmp.ne.s32.totalorder %s196, %s199
      %p208 = scmp.eq.s32.totalorder %s25, 1
      %p209 = por %p207, %p208
      %p210 = scmp.ne.s32.totalorder %s199, %s200
      %p211 = scmp.eq.s32.totalorder %s25, 0
      %p212 = por %p210, %p211
      %p213 = scmp.ne.s32.totalorder %s199, %s200
      %p214 = scmp.eq.s32.totalorder %s26, 1
      %p215 = por %p213, %p214
      %p217 = scmp.ne.s32.totalorder %s200, %s216
      %p218 = scmp.eq.s32.totalorder %s26, 0
      %p219 = por %p217, %p218
      %p220 = scmp.le.s32.totalorder 1, %s20
      %p221 = scmp.lt.s32.totalorder %s20, 3
      %p222 = pnand %p220, %p221
      %p223 = pneg %p222
      // Predicated region
      $region9: #{tpu_custom_call.1} parent=5 // pred_check
        _
      $region10: #{tpu_custom_call.1} parent=5 // pred_check_branch
        %225 = sbr.rel (%p222) target = $region12
      $region11: #{tpu_custom_call.1} parent=5 // pred_region
        %s226 = ssub.s32 %s20, 1
        // Predicated region
        $region13: #{tpu_custom_call.1} parent=11 // pred_check
          %p227 = pneg %p79
        $region14: #{tpu_custom_call.1} parent=11 // pred_check_branch
          %229 = sbr.rel (%p227) target = $region16
        $region15: #{tpu_custom_call.1} parent=11 // pred_region
          %s231 = ssub.s32 256, 256
          %232 = vsyncadd [#allocation9], %s231
          %s233 = sshll.u32 [#allocation8], 4
          %s234 = int_to_ptr.vmem [resolvable:$true] %s233
          %239 = dma.hbm_to_vmem [thread:$0]  %s1, 256, %s234, [#allocation9], 64, 64, 4
        $region16: #{tpu_custom_call.1} parent=11 // pred_fallthru
          _
        // Predicated region
        $region17: #{tpu_custom_call.1} parent=11 // pred_check
          %p240 = pneg %p100
        $region18: #{tpu_custom_call.1} parent=11 // pred_check_branch
          %242 = sbr.rel (%p240) target = $region20
        $region19: #{tpu_custom_call.1} parent=11 // pred_region
          _
        $region20: #{tpu_custom_call.1} parent=11 // pred_fallthru
          _
        // Predicated region
        $region21: #{tpu_custom_call.1} parent=11 // pred_check
          %p243 = pneg %p121
        $region22: #{tpu_custom_call.1} parent=11 // pred_check_branch
          %245 = sbr.rel (%p243) target = $region24
        $region23: #{tpu_custom_call.1} parent=11 // pred_region
          %s247 = ssub.s32 256, 256
          %248 = vsyncadd [#allocation9], %s247
          %s249 = sshll.u32 [#allocation10], 4
          %s250 = int_to_ptr.vmem [resolvable:$true] %s249
          %255 = dma.hbm_to_vmem [thread:$0]  %s3, 256, %s250, [#allocation9], 64, 64, 4
        $region24: #{tpu_custom_call.1} parent=11 // pred_fallthru
          _
        // Predicated region
        $region25: #{tpu_custom_call.1} parent=11 // pred_check
          %p256 = pneg %p142
        $region26: #{tpu_custom_call.1} parent=11 // pred_check_branch
          %258 = sbr.rel (%p256) target = $region28
        $region27: #{tpu_custom_call.1} parent=11 // pred_region
          _
        $region28: #{tpu_custom_call.1} parent=11 // pred_fallthru
          _
        // Predicated region
        $region29: #{tpu_custom_call.1} parent=11 // pred_check
          %p259 = pneg %p163
        $region30: #{tpu_custom_call.1} parent=11 // pred_check_branch
          %261 = sbr.rel (%p259) target = $region32
        $region31: #{tpu_custom_call.1} parent=11 // pred_region
          _
        $region32: #{tpu_custom_call.1} parent=11 // pred_fallthru
          _
        // Predicated region
        $region33: #{tpu_custom_call.1} parent=11 // pred_check
          %p262 = pneg %p184
        $region34: #{tpu_custom_call.1} parent=11 // pred_check_branch
          %264 = sbr.rel (%p262) target = $region36
        $region35: #{tpu_custom_call.1} parent=11 // pred_region
          _
        $region36: #{tpu_custom_call.1} parent=11 // pred_fallthru
          _
      $region12: #{tpu_custom_call.1} parent=5 // pred_fallthru
        _
      %p265 = scmp.lt.s32.totalorder %s20, 2
      // Predicated region
      $region37: #{tpu_custom_call.1} parent=5 // pred_check
        %p266 = pneg %p265
      $region38: #{tpu_custom_call.1} parent=5 // pred_check_branch
        %268 = sbr.rel (%p266) target = $region40
      $region39: #{tpu_custom_call.1} parent=5 // pred_region
        // Predicated region
        $region41: #{tpu_custom_call.1} parent=39 // pred_check
          %p269 = pneg %p52
        $region42: #{tpu_custom_call.1} parent=39 // pred_check_branch
          %271 = sbr.rel (%p269) target = $region44
        $region43: #{tpu_custom_call.1} parent=39 // pred_region
          %s272 = sand.u32 %s42, 1
          %s273 = scalar_lea.sflag [#allocation6], %s272
          %s274 = sand.u32 %s42, 1
          %s275 = smul.addr %s274, 4
          %s276 = scalar_lea.vmem [#allocation5], %s275
          %s278 = ssub.s32 64, 64
          %279 = vsyncadd %s273, %s278
          %s280 = smul.addr %s27, 64
          %s281 = scalar_lea.hbm %s0, %s280
          %s283 = sshll.u32 %s276, 4
          %s284 = int_to_ptr.vmem [resolvable:$true] %s283
          %286 = dma.hbm_to_vmem [thread:$0]  %s281, 64, %s284, %s273
        $region44: #{tpu_custom_call.1} parent=39 // pred_fallthru
          _
      $region40: #{tpu_custom_call.1} parent=5 // pred_fallthru
        _
      %p287 = scmp.le.s32.totalorder 1, %s20
      %p288 = scmp.lt.s32.totalorder %s20, 3
      %p289 = pnand %p287, %p288
      %p290 = pneg %p289
      // Predicated region
      $region45: #{tpu_custom_call.1} parent=5 // pred_check
        _
      $region46: #{tpu_custom_call.1} parent=5 // pred_check_branch
        %292 = sbr.rel (%p289) target = $region48
      $region47: #{tpu_custom_call.1} parent=5 // pred_region
        %s293 = ssub.s32 %s20, 1
        %s294 = sand.u32 %s45, 1
        %s295 = scalar_lea.sflag [#allocation6], %s294
        %s296 = sand.u32 %s45, 1
        %s297 = smul.addr %s296, 4
        %s298 = scalar_lea.vmem [#allocation5], %s297
        // Predicated region
        $region49: #{tpu_custom_call.1} parent=47 // pred_check
          %p299 = pneg %p58
        $region50: #{tpu_custom_call.1} parent=47 // pred_check_branch
          %301 = sbr.rel (%p299) target = $region52
        $region51: #{tpu_custom_call.1} parent=47 // pred_region
          %302 = dma.done %s295, 64
        $region52: #{tpu_custom_call.1} parent=47 // pred_fallthru
          _
        // Predicated region
        $region53: #{tpu_custom_call.1} parent=47 // pred_check
          %p303 = pneg %p79
        $region54: #{tpu_custom_call.1} parent=47 // pred_check_branch
          %305 = sbr.rel (%p303) target = $region56
        $region55: #{tpu_custom_call.1} parent=47 // pred_region
          %306 = dma.done [#allocation9], 256
        $region56: #{tpu_custom_call.1} parent=47 // pred_fallthru
          _
        // Predicated region
        $region57: #{tpu_custom_call.1} parent=47 // pred_check
          %p307 = pneg %p121
        $region58: #{tpu_custom_call.1} parent=47 // pred_check_branch
          %309 = sbr.rel (%p307) target = $region60
        $region59: #{tpu_custom_call.1} parent=47 // pred_region
          %310 = dma.done [#allocation9], 256
        $region60: #{tpu_custom_call.1} parent=47 // pred_fallthru
          _
        %s311 = sand.u32 %s45, 1
        %s312 = scalar_lea.sflag [#allocation6], %s311
        %s313 = sand.u32 %s45, 1
        %s314 = smul.addr %s313, 4
        %s315 = scalar_lea.vmem [#allocation5], %s314
        %p316 = pneg %p58
        %p317 = pneg %p55
        %p318 = pneg %p79
        %p319 = pneg %p76
        %p320 = pneg %p100
        %p321 = pneg %p97
        %p322 = pneg %p121
        %p323 = pneg %p118
        %p324 = pneg %p142
        %p325 = pneg %p139
        %p326 = pneg %p163
        %p327 = pneg %p160
        %p328 = pneg %p184
        %p329 = pneg %p181
        %p330 = pneg %p212
        %p331 = pneg %p209
        %s332 = sand.u32 %s199, 1
        %s333 = scalar_lea.sflag [#allocation7], %s332
        %s334 = sand.u32 %s199, 1
        %s335 = smul.addr %s334, 8
        %s336 = scalar_lea.vmem [#allocation11], %s335
        %p338 = scmp.eq.s32.totalorder %s30, 0
        // Predicated region
        $region61: #{tpu_custom_call.1} parent=47 // pred_check
          %p339 = pneg %p338
        $region62: #{tpu_custom_call.1} parent=47 // pred_check_branch
          %341 = sbr.rel (%p339) target = $region64
        $region63: #{tpu_custom_call.1} parent=47 // pred_region
          %v342 = vld [vmem:[%s298] sm:$0xf]
          %v343 = vld [vmem:[#allocation10] sm:$0xf]
          %v344 = vld [vmem:[#allocation10 + $0x4] sm:$0xf]
          %v345 = vld [vmem:[#allocation10 + $0x8] sm:$0xf]
          %v346 = vld [vmem:[#allocation10 + $0xc] sm:$0xf]
          %v347 = vld [vmem:[%s4] sm:$0x1]
          %v349 = vlaneseq
          %v350 = vshrl.u32 %v349, 7
          %v351 = vsub.s32 0, %v350
          %v352 = vrot.slane %v347, %v351
          %v358 = vunpack.c.l.b16 %v343
          %v359 = vunpack.c.l.b16 %v344
          %v360 = vunpack.c.l.b16 %v345
          %v361 = vunpack.c.l.b16 %v346
          %v362 = vpack.c.b16 %v359, %v358
          %v363 = vpack.c.b16 %v361, %v360
          %vm366 = vcmask 261120
          %v368 = vsel %vm366, %v342, 0
          %370 = vmatprep.subr.bf16.mxu0 0
          %371 = vmatpush1.bf16.msra.mxu0 %v362
          %372 = vmatprep.subr.bf16.mxu0 0
          %373 = vmatpush1.bf16.msra.mxu0 %v363
          %374 = vmatprep.subr.bf16.mxu0 0
          %375 = vmatpush1.bf16.msra.mxu0 0
          %376 = vmatprep.subr.bf16.mxu0 0
          %377 = vmatpush1.bf16.msra.mxu0 0
          %378 = vmatprep.subr.bf16.mxu0 0
          %379 = vmatpush1.bf16.msra.mxu0 0
          %380 = vmatprep.subr.bf16.mxu0 0
          %381 = vmatpush1.bf16.msra.mxu0 0
          %382 = vmatprep.subr.bf16.mxu0 0
          %383 = vmatpush1.bf16.msra.mxu0 0
          %384 = vmatprep.subr.bf16.mxu0 0
          %385 = vmatpush1.bf16.msra.mxu0 0
          %386 = vmatprep.subr.bf16.mxu0 0
          %387 = vmatpush1.bf16.msra.mxu0 0
          %388 = vmatprep.subr.bf16.mxu0 0
          %389 = vmatpush1.bf16.msra.mxu0 0
          %390 = vmatprep.subr.bf16.mxu0 0
          %391 = vmatpush1.bf16.msra.mxu0 0
          %392 = vmatprep.subr.bf16.mxu0 0
          %393 = vmatpush1.bf16.msra.mxu0 0
          %394 = vmatprep.subr.bf16.mxu0 0
          %395 = vmatpush1.bf16.msra.mxu0 0
          %396 = vmatprep.subr.bf16.mxu0 0
          %397 = vmatpush1.bf16.msra.mxu0 0
          %398 = vmatprep.subr.bf16.mxu0 0
          %399 = vmatpush1.bf16.msra.mxu0 0
          %400 = vmatprep.subr.bf16.mxu0 0
          %401 = vmatpush1.bf16.msra.mxu0 0
          %402 = vmatprep.mubr.bf16.mxu0 0
          %403 = vmatmul.mubr.bf16.gmra.mrb[0].mxu0 %v368
          %v404 = vpop.f32.mrb[0].mxu0
          %v405 = vadd.f32 %v352, %v404
          %v406 = vpop.f32.mrb[0].mxu0
          %v407 = vpop.f32.mrb[0].mxu0
          %v408 = vpop.f32.mrb[0].mxu0
          %409 = vdwg.mxu0
          %v410 = vpack.c.bf16 %v405, %v405
          %vm411 = vcmask 519168
          %412 = vst.msk [vmem:[#allocation2] sm:$0xf] %vm411, %v410
        $region64: #{tpu_custom_call.1} parent=47 // pred_fallthru
          _
        %s413 = smul.u32 %s30, 8
        %s414 = sshra.s32 %s413, 3
        %s415 = sand.u32 %s413, 7
        %s416 = smul.addr %s414, 4
        %s417 = scalar_lea.vmem %s298, %s416 [#allocation5]
        %v418 = vld [vmem:[%s417] sm:$0xf]
        %v419 = vld [vmem:[#allocation8] sm:$0xf]
        %v420 = vld [vmem:[#allocation8 + $0x4] sm:$0xf]
        %v421 = vld [vmem:[#allocation8 + $0x8] sm:$0xf]
        %v422 = vld [vmem:[#allocation8 + $0xc] sm:$0xf]
        %v423 = vld [vmem:[%s2] sm:$0x1]
        %v425 = vlaneseq
        %v426 = vshrl.u32 %v425, 7
        %v427 = vsub.s32 0, %v426
        %v428 = vrot.slane %v423, %v427
        %v434 = vunpack.c.l.b16 %v419
        %v435 = vunpack.c.l.b16 %v420
        %v436 = vunpack.c.l.b16 %v421
        %v437 = vunpack.c.l.b16 %v422
        %v438 = vpack.c.b16 %v435, %v434
        %v439 = vpack.c.b16 %v437, %v436
        %vm442 = vcmask 261120
        %v444 = vsel %vm442, %v418, 0
        %446 = vmatprep.subr.bf16.mxu0 0
        %447 = vmatpush1.bf16.msra.mxu0 %v438
        %448 = vmatprep.subr.bf16.mxu0 0
        %449 = vmatpush1.bf16.msra.mxu0 %v439
        %450 = vmatprep.subr.bf16.mxu0 0
        %451 = vmatpush1.bf16.msra.mxu0 0
        %452 = vmatprep.subr.bf16.mxu0 0
        %453 = vmatpush1.bf16.msra.mxu0 0
        %454 = vmatprep.subr.bf16.mxu0 0
        %455 = vmatpush1.bf16.msra.mxu0 0
        %456 = vmatprep.subr.bf16.mxu0 0
        %457 = vmatpush1.bf16.msra.mxu0 0
        %458 = vmatprep.subr.bf16.mxu0 0
        %459 = vmatpush1.bf16.msra.mxu0 0
        %460 = vmatprep.subr.bf16.mxu0 0
        %461 = vmatpush1.bf16.msra.mxu0 0
        %462 = vmatprep.subr.bf16.mxu0 0
        %463 = vmatpush1.bf16.msra.mxu0 0
        %464 = vmatprep.subr.bf16.mxu0 0
        %465 = vmatpush1.bf16.msra.mxu0 0
        %466 = vmatprep.subr.bf16.mxu0 0
        %467 = vmatpush1.bf16.msra.mxu0 0
        %468 = vmatprep.subr.bf16.mxu0 0
        %469 = vmatpush1.bf16.msra.mxu0 0
        %470 = vmatprep.subr.bf16.mxu0 0
        %471 = vmatpush1.bf16.msra.mxu0 0
        %472 = vmatprep.subr.bf16.mxu0 0
        %473 = vmatpush1.bf16.msra.mxu0 0
        %474 = vmatprep.subr.bf16.mxu0 0
        %475 = vmatpush1.bf16.msra.mxu0 0
        %476 = vmatprep.subr.bf16.mxu0 0
        %477 = vmatpush1.bf16.msra.mxu0 0
        %478 = vmatprep.mubr.bf16.mxu0 0
        %479 = vmatmul.mubr.bf16.gmra.mrb[0].mxu0 %v444
        %v480 = vpop.f32.mrb[0].mxu0
        %v481 = vadd.f32 %v428, %v480
        %v482 = vpop.f32.mrb[0].mxu0
        %v483 = vpop.f32.mrb[0].mxu0
        %v484 = vpop.f32.mrb[0].mxu0
        %485 = vdwg.mxu0
        %v486 = vpack.c.bf16 %v481, %v481
        %vm487 = vcmask 257024
        %488 = vst.msk [vmem:[#allocation3] sm:$0xf] %vm487, %v486
        %v489 = vld [vmem:[#allocation3] sm:$0xf]
        %v490 = vld [vmem:[#allocation2] sm:$0xf]
        %vm491 = vcmask 64512
        %v493 = vsel %vm491, %v489, 0
        %v496 = vsel %vm491, %v490, 0
        %498 = vmatprep.subr.bf16.mxu0 0
        %499 = vmatpush1.bf16.xpose.msra.mxu0 %v496
        %500 = vmatprep.subr.bf16.mxu0 0
        %501 = vmatpush1.bf16.xpose.msra.mxu0 0
        %502 = vmatprep.subr.bf16.mxu0 0
        %503 = vmatpush1.bf16.xpose.msra.mxu0 0
        %504 = vmatprep.subr.bf16.mxu0 0
        %505 = vmatpush1.bf16.xpose.msra.mxu0 0
        %506 = vmatprep.subr.bf16.mxu0 0
        %507 = vmatpush1.bf16.xpose.msra.mxu0 0
        %508 = vmatprep.subr.bf16.mxu0 0
        %509 = vmatpush1.bf16.xpose.msra.mxu0 0
        %510 = vmatprep.subr.bf16.mxu0 0
        %511 = vmatpush1.bf16.xpose.msra.mxu0 0
        %512 = vmatprep.subr.bf16.mxu0 0
        %513 = vmatpush1.bf16.xpose.msra.mxu0 0
        %514 = vmatprep.subr.bf16.mxu0 0
        %515 = vmatpush1.bf16.xpose.msra.mxu0 0
        %516 = vmatprep.subr.bf16.mxu0 0
        %517 = vmatpush1.bf16.xpose.msra.mxu0 0
        %518 = vmatprep.subr.bf16.mxu0 0
        %519 = vmatpush1.bf16.xpose.msra.mxu0 0
        %520 = vmatprep.subr.bf16.mxu0 0
        %521 = vmatpush1.bf16.xpose.msra.mxu0 0
        %522 = vmatprep.subr.bf16.mxu0 0
        %523 = vmatpush1.bf16.xpose.msra.mxu0 0
        %524 = vmatprep.subr.bf16.mxu0 0
        %525 = vmatpush1.bf16.xpose.msra.mxu0 0
        %526 = vmatprep.subr.bf16.mxu0 0
        %527 = vmatpush1.bf16.xpose.msra.mxu0 0
        %528 = vmatprep.subr.bf16.mxu0 0
        %529 = vmatpush1.bf16.xpose.msra.mxu0 0
        %530 = vmatprep.mubr.bf16.mxu0 0
        %531 = vmatmul.mubr.bf16.gmra.mrb[0].mxu0 %v493
        %v532 = vpop.f32.mrb[0].mxu0
        %v533 = vadd.f32 0.0, %v532
        %v534 = vpop.f32.mrb[0].mxu0
        %v535 = vpop.f32.mrb[0].mxu0
        %v536 = vpop.f32.mrb[0].mxu0
        %537 = vdwg.mxu0
        %v538 = vsel %vm491, %v533, -inf
        %539 = vmax.xlane.f32.xlu0 %v538
        %v540 = vpop.xlane.xlu0 %539
        %v541 = vsub.f32 %v533, %v540
        %v542 = vmul.f32 %v541, 1.442695
        %v543 = vpow.pop %v542
        %v544 = vsel %vm491, %v543, 0.0
        %545 = vadd.xlane.f32.xlu0 %v544
        %v546 = vpop.xlane.xlu0 %545
        %v547 = vrcp.pop %v546
        %v548 = vpack.c.bf16 %v543, %v543
        %v550 = vunpack.c.l.b16 %v490
        %v551 = vpack.c.b16 %v550, %v550
        %552 = vrot.lane.b32.xlu0 %v551, 96
        %v553 = vpop.permute.xlu0 %552
        %v555 = vsel %vm491, %v548, 0
        %vm557 = vcmask 1043456
        %v559 = vsel %vm557, %v553, 0
        %561 = vmatprep.subr.bf16.mxu0 0
        %562 = vmatpush1.bf16.msra.mxu0 %v559
        %563 = vmatprep.subr.bf16.mxu0 0
        %564 = vmatpush1.bf16.msra.mxu0 0
        %565 = vmatprep.subr.bf16.mxu0 0
        %566 = vmatpush1.bf16.msra.mxu0 0
        %567 = vmatprep.subr.bf16.mxu0 0
        %568 = vmatpush1.bf16.msra.mxu0 0
        %569 = vmatprep.subr.bf16.mxu0 0
        %570 = vmatpush1.bf16.msra.mxu0 0
        %571 = vmatprep.subr.bf16.mxu0 0
        %572 = vmatpush1.bf16.msra.mxu0 0
        %573 = vmatprep.subr.bf16.mxu0 0
        %574 = vmatpush1.bf16.msra.mxu0 0
        %575 = vmatprep.subr.bf16.mxu0 0
        %576 = vmatpush1.bf16.msra.mxu0 0
        %577 = vmatprep.subr.bf16.mxu0 0
        %578 = vmatpush1.bf16.msra.mxu0 0
        %579 = vmatprep.subr.bf16.mxu0 0
        %580 = vmatpush1.bf16.msra.mxu0 0
        %581 = vmatprep.subr.bf16.mxu0 0
        %582 = vmatpush1.bf16.msra.mxu0 0
        %583 = vmatprep.subr.bf16.mxu0 0
        %584 = vmatpush1.bf16.msra.mxu0 0
        %585 = vmatprep.subr.bf16.mxu0 0
        %586 = vmatpush1.bf16.msra.mxu0 0
        %587 = vmatprep.subr.bf16.mxu0 0
        %588 = vmatpush1.bf16.msra.mxu0 0
        %589 = vmatprep.subr.bf16.mxu0 0
        %590 = vmatpush1.bf16.msra.mxu0 0
        %591 = vmatprep.subr.bf16.mxu0 0
        %592 = vmatpush1.bf16.msra.mxu0 0
        %593 = vmatprep.mubr.bf16.mxu0 0
        %594 = vmatmul.mubr.bf16.gmra.mrb[0].mxu0 %v555
        %v595 = vpop.f32.mrb[0].mxu0
        %v596 = vadd.f32 0.0, %v595
        %v597 = vpop.f32.mrb[0].mxu0
        %v598 = vpop.f32.mrb[0].mxu0
        %v599 = vpop.f32.mrb[0].mxu0
        %600 = vdwg.mxu0
        %v601 = vmul.f32 %v596, %v547
        %v602 = vpack.c.bf16 %v601, %v601
        %vm603 = vcmask 60416
        %604 = vst.msk [vmem:[#allocation4] sm:$0xf] %vm603, %v602
        %v605 = vld [vmem:[#allocation3] sm:$0xf]
        %v606 = vld [vmem:[#allocation2] sm:$0xf]
        %v608 = vunpack.c.l.b16 %v605
        %v609 = vpack.c.b16 %v608, %v608
        %610 = vrot.lane.b32.xlu0 %v609, 120
        %v611 = vpop.permute.xlu0 %610
        %v613 = vunpack.c.l.b16 %v606
        %v614 = vpack.c.b16 %v613, %v613
        %615 = vrot.lane.b32.xlu0 %v614, 120
        %v616 = vpop.permute.xlu0 %615
        %v618 = vsel %vm491, %v611, 0
        %v621 = vsel %vm491, %v616, 0
        %623 = vmatprep.subr.bf16.mxu0 0
        %624 = vmatpush1.bf16.xpose.msra.mxu0 %v621
        %625 = vmatprep.subr.bf16.mxu0 0
        %626 = vmatpush1.bf16.xpose.msra.mxu0 0
        %627 = vmatprep.subr.bf16.mxu0 0
        %628 = vmatpush1.bf16.xpose.msra.mxu0 0
        %629 = vmatprep.subr.bf16.mxu0 0
        %630 = vmatpush1.bf16.xpose.msra.mxu0 0
        %631 = vmatprep.subr.bf16.mxu0 0
        %632 = vmatpush1.bf16.xpose.msra.mxu0 0
        %633 = vmatprep.subr.bf16.mxu0 0
        %634 = vmatpush1.bf16.xpose.msra.mxu0 0
        %635 = vmatprep.subr.bf16.mxu0 0
        %636 = vmatpush1.bf16.xpose.msra.mxu0 0
        %637 = vmatprep.subr.bf16.mxu0 0
        %638 = vmatpush1.bf16.xpose.msra.mxu0 0
        %639 = vmatprep.subr.bf16.mxu0 0
        %640 = vmatpush1.bf16.xpose.msra.mxu0 0
        %641 = vmatprep.subr.bf16.mxu0 0
        %642 = vmatpush1.bf16.xpose.msra.mxu0 0
        %643 = vmatprep.subr.bf16.mxu0 0
        %644 = vmatpush1.bf16.xpose.msra.mxu0 0
        %645 = vmatprep.subr.bf16.mxu0 0
        %646 = vmatpush1.bf16.xpose.msra.mxu0 0
        %647 = vmatprep.subr.bf16.mxu0 0
        %648 = vmatpush1.bf16.xpose.msra.mxu0 0
        %649 = vmatprep.subr.bf16.mxu0 0
        %650 = vmatpush1.bf16.xpose.msra.mxu0 0
        %651 = vmatprep.subr.bf16.mxu0 0
        %652 = vmatpush1.bf16.xpose.msra.mxu0 0
        %653 = vmatprep.subr.bf16.mxu0 0
        %654 = vmatpush1.bf16.xpose.msra.mxu0 0
        %655 = vmatprep.mubr.bf16.mxu0 0
        %656 = vmatmul.mubr.bf16.gmra.mrb[0].mxu0 %v618
        %v657 = vpop.f32.mrb[0].mxu0
        %v658 = vadd.f32 0.0, %v657
        %v659 = vpop.f32.mrb[0].mxu0
        %v660 = vpop.f32.mrb[0].mxu0
        %v661 = vpop.f32.mrb[0].mxu0
        %662 = vdwg.mxu0
        %v663 = vsel %vm491, %v658, -inf
        %664 = vmax.xlane.f32.xlu0 %v663
        %v665 = vpop.xlane.xlu0 %664
        %v666 = vsub.f32 %v658, %v665
        %v667 = vmul.f32 %v666, 1.442695
        %v668 = vpow.pop %v667
        %v669 = vsel %vm491, %v668, 0.0
        %670 = vadd.xlane.f32.xlu0 %v669
        %v671 = vpop.xlane.xlu0 %670
        %v672 = vrcp.pop %v671
        %v673 = vpack.c.bf16 %v668, %v668
        %674 = vrot.lane.b32.xlu0 %v614, 88
        %v675 = vpop.permute.xlu0 %674
        %v677 = vsel %vm491, %v673, 0
        %v680 = vsel %vm557, %v675, 0
        %682 = vmatprep.subr.bf16.mxu0 0
        %683 = vmatpush1.bf16.msra.mxu0 %v680
        %684 = vmatprep.subr.bf16.mxu0 0
        %685 = vmatpush1.bf16.msra.mxu0 0
        %686 = vmatprep.subr.bf16.mxu0 0
        %687 = vmatpush1.bf16.msra.mxu0 0
        %688 = vmatprep.subr.bf16.mxu0 0
        %689 = vmatpush1.bf16.msra.mxu0 0
        %690 = vmatprep.subr.bf16.mxu0 0
        %691 = vmatpush1.bf16.msra.mxu0 0
        %692 = vmatprep.subr.bf16.mxu0 0
        %693 = vmatpush1.bf16.msra.mxu0 0
        %694 = vmatprep.subr.bf16.mxu0 0
        %695 = vmatpush1.bf16.msra.mxu0 0
        %696 = vmatprep.subr.bf16.mxu0 0
        %697 = vmatpush1.bf16.msra.mxu0 0
        %698 = vmatprep.subr.bf16.mxu0 0
        %699 = vmatpush1.bf16.msra.mxu0 0
        %700 = vmatprep.subr.bf16.mxu0 0
        %701 = vmatpush1.bf16.msra.mxu0 0
        %702 = vmatprep.subr.bf16.mxu0 0
        %703 = vmatpush1.bf16.msra.mxu0 0
        %704 = vmatprep.subr.bf16.mxu0 0
        %705 = vmatpush1.bf16.msra.mxu0 0
        %706 = vmatprep.subr.bf16.mxu0 0
        %707 = vmatpush1.bf16.msra.mxu0 0
        %708 = vmatprep.subr.bf16.mxu0 0
        %709 = vmatpush1.bf16.msra.mxu0 0
        %710 = vmatprep.subr.bf16.mxu0 0
        %711 = vmatpush1.bf16.msra.mxu0 0
        %712 = vmatprep.subr.bf16.mxu0 0
        %713 = vmatpush1.bf16.msra.mxu0 0
        %714 = vmatprep.mubr.bf16.mxu0 0
        %715 = vmatmul.mubr.bf16.gmra.mrb[0].mxu0 %v677
        %v716 = vpop.f32.mrb[0].mxu0
        %v717 = vadd.f32 0.0, %v716
        %v718 = vpop.f32.mrb[0].mxu0
        %v719 = vpop.f32.mrb[0].mxu0
        %v720 = vpop.f32.mrb[0].mxu0
        %721 = vdwg.mxu0
        %v722 = vmul.f32 %v717, %v672
        %v723 = vpack.c.bf16 %v722, %v722
        %v725 = vunpack.c.l.b16 %v723
        %v726 = vpack.c.b16 %v725, %v725
        %727 = vrot.lane.b32.xlu0 %v726, 8
        %v728 = vpop.permute.xlu0 %727
        %vm730 = vcmask 126016
        %731 = vst.msk [vmem:[#allocation4] sm:$0xf] %vm730, %v728
        %v732 = vld [vmem:[#allocation3] sm:$0xf]
        %v733 = vld [vmem:[#allocation2] sm:$0xf]
        %v735 = vunpack.c.l.b16 %v732
        %v736 = vpack.c.b16 %v735, %v735
        %737 = vrot.lane.b32.xlu0 %v736, 112
        %v738 = vpop.permute.xlu0 %737
        %v740 = vunpack.c.l.b16 %v733
        %v741 = vpack.c.b16 %v740, %v740
        %742 = vrot.lane.b32.xlu0 %v741, 112
        %v743 = vpop.permute.xlu0 %742
        %v745 = vsel %vm491, %v738, 0
        %v748 = vsel %vm491, %v743, 0
        %750 = vmatprep.subr.bf16.mxu0 0
        %751 = vmatpush1.bf16.xpose.msra.mxu0 %v748
        %752 = vmatprep.subr.bf16.mxu0 0
        %753 = vmatpush1.bf16.xpose.msra.mxu0 0
        %754 = vmatprep.subr.bf16.mxu0 0
        %755 = vmatpush1.bf16.xpose.msra.mxu0 0
        %756 = vmatprep.subr.bf16.mxu0 0
        %757 = vmatpush1.bf16.xpose.msra.mxu0 0
        %758 = vmatprep.subr.bf16.mxu0 0
        %759 = vmatpush1.bf16.xpose.msra.mxu0 0
        %760 = vmatprep.subr.bf16.mxu0 0
        %761 = vmatpush1.bf16.xpose.msra.mxu0 0
        %762 = vmatprep.subr.bf16.mxu0 0
        %763 = vmatpush1.bf16.xpose.msra.mxu0 0
        %764 = vmatprep.subr.bf16.mxu0 0
        %765 = vmatpush1.bf16.xpose.msra.mxu0 0
        %766 = vmatprep.subr.bf16.mxu0 0
        %767 = vmatpush1.bf16.xpose.msra.mxu0 0
        %768 = vmatprep.subr.bf16.mxu0 0
        %769 = vmatpush1.bf16.xpose.msra.mxu0 0
        %770 = vmatprep.subr.bf16.mxu0 0
        %771 = vmatpush1.bf16.xpose.msra.mxu0 0
        %772 = vmatprep.subr.bf16.mxu0 0
        %773 = vmatpush1.bf16.xpose.msra.mxu0 0
        %774 = vmatprep.subr.bf16.mxu0 0
        %775 = vmatpush1.bf16.xpose.msra.mxu0 0
        %776 = vmatprep.subr.bf16.mxu0 0
        %777 = vmatpush1.bf16.xpose.msra.mxu0 0
        %778 = vmatprep.subr.bf16.mxu0 0
        %779 = vmatpush1.bf16.xpose.msra.mxu0 0
        %780 = vmatprep.subr.bf16.mxu0 0
        %781 = vmatpush1.bf16.xpose.msra.mxu0 0
        %782 = vmatprep.mubr.bf16.mxu0 0
        %783 = vmatmul.mubr.bf16.gmra.mrb[0].mxu0 %v745
        %v784 = vpop.f32.mrb[0].mxu0
        %v785 = vadd.f32 0.0, %v784
        %v786 = vpop.f32.mrb[0].mxu0
        %v787 = vpop.f32.mrb[0].mxu0
        %v788 = vpop.f32.mrb[0].mxu0
        %789 = vdwg.mxu0
        %v790 = vsel %vm491, %v785, -inf
        %791 = vmax.xlane.f32.xlu0 %v790
        %v792 = vpop.xlane.xlu0 %791
        %v793 = vsub.f32 %v785, %v792
        %v794 = vmul.f32 %v793, 1.442695
        %v795 = vpow.pop %v794
        %v796 = vsel %vm491, %v795, 0.0
        %797 = vadd.xlane.f32.xlu0 %v796
        %v798 = vpop.xlane.xlu0 %797
        %v799 = vrcp.pop %v798
        %v800 = vpack.c.bf16 %v795, %v795
        %801 = vrot.lane.b32.xlu0 %v741, 80
        %v802 = vpop.permute.xlu0 %801
        %v804 = vsel %vm491, %v800, 0
        %v807 = vsel %vm557, %v802, 0
        %809 = vmatprep.subr.bf16.mxu0 0
        %810 = vmatpush1.bf16.msra.mxu0 %v807
        %811 = vmatprep.subr.bf16.mxu0 0
        %812 = vmatpush1.bf16.msra.mxu0 0
        %813 = vmatprep.subr.bf16.mxu0 0
        %814 = vmatpush1.bf16.msra.mxu0 0
        %815 = vmatprep.subr.bf16.mxu0 0
        %816 = vmatpush1.bf16.msra.mxu0 0
        %817 = vmatprep.subr.bf16.mxu0 0
        %818 = vmatpush1.bf16.msra.mxu0 0
        %819 = vmatprep.subr.bf16.mxu0 0
        %820 = vmatpush1.bf16.msra.mxu0 0
        %821 = vmatprep.subr.bf16.mxu0 0
        %822 = vmatpush1.bf16.msra.mxu0 0
        %823 = vmatprep.subr.bf16.mxu0 0
        %824 = vmatpush1.bf16.msra.mxu0 0
        %825 = vmatprep.subr.bf16.mxu0 0
        %826 = vmatpush1.bf16.msra.mxu0 0
        %827 = vmatprep.subr.bf16.mxu0 0
        %828 = vmatpush1.bf16.msra.mxu0 0
        %829 = vmatprep.subr.bf16.mxu0 0
        %830 = vmatpush1.bf16.msra.mxu0 0
        %831 = vmatprep.subr.bf16.mxu0 0
        %832 = vmatpush1.bf16.msra.mxu0 0
        %833 = vmatprep.subr.bf16.mxu0 0
        %834 = vmatpush1.bf16.msra.mxu0 0
        %835 = vmatprep.subr.bf16.mxu0 0
        %836 = vmatpush1.bf16.msra.mxu0 0
        %837 = vmatprep.subr.bf16.mxu0 0
        %838 = vmatpush1.bf16.msra.mxu0 0
        %839 = vmatprep.subr.bf16.mxu0 0
        %840 = vmatpush1.bf16.msra.mxu0 0
        %841 = vmatprep.mubr.bf16.mxu0 0
        %842 = vmatmul.mubr.bf16.gmra.mrb[0].mxu0 %v804
        %v843 = vpop.f32.mrb[0].mxu0
        %v844 = vadd.f32 0.0, %v843
        %v845 = vpop.f32.mrb[0].mxu0
        %v846 = vpop.f32.mrb[0].mxu0
        %v847 = vpop.f32.mrb[0].mxu0
        %848 = vdwg.mxu0
        %v849 = vmul.f32 %v844, %v799
        %v850 = vpack.c.bf16 %v849, %v849
        %v852 = vunpack.c.l.b16 %v850
        %v853 = vpack.c.b16 %v852, %v852
        %854 = vrot.lane.b32.xlu0 %v853, 16
        %v855 = vpop.permute.xlu0 %854
        %vm857 = vcmask 191616
        %858 = vst.msk [vmem:[#allocation4] sm:$0xf] %vm857, %v855
        %v859 = vld [vmem:[#allocation3] sm:$0xf]
        %v860 = vld [vmem:[#allocation2] sm:$0xf]
        %v862 = vunpack.c.l.b16 %v859
        %v863 = vpack.c.b16 %v862, %v862
        %864 = vrot.lane.b32.xlu0 %v863, 104
        %v865 = vpop.permute.xlu0 %864
        %v867 = vunpack.c.l.b16 %v860
        %v868 = vpack.c.b16 %v867, %v867
        %869 = vrot.lane.b32.xlu0 %v868, 104
        %v870 = vpop.permute.xlu0 %869
        %v872 = vsel %vm491, %v865, 0
        %v875 = vsel %vm491, %v870, 0
        %877 = vmatprep.subr.bf16.mxu0 0
        %878 = vmatpush1.bf16.xpose.msra.mxu0 %v875
        %879 = vmatprep.subr.bf16.mxu0 0
        %880 = vmatpush1.bf16.xpose.msra.mxu0 0
        %881 = vmatprep.subr.bf16.mxu0 0
        %882 = vmatpush1.bf16.xpose.msra.mxu0 0
        %883 = vmatprep.subr.bf16.mxu0 0
        %884 = vmatpush1.bf16.xpose.msra.mxu0 0
        %885 = vmatprep.subr.bf16.mxu0 0
        %886 = vmatpush1.bf16.xpose.msra.mxu0 0
        %887 = vmatprep.subr.bf16.mxu0 0
        %888 = vmatpush1.bf16.xpose.msra.mxu0 0
        %889 = vmatprep.subr.bf16.mxu0 0
        %890 = vmatpush1.bf16.xpose.msra.mxu0 0
        %891 = vmatprep.subr.bf16.mxu0 0
        %892 = vmatpush1.bf16.xpose.msra.mxu0 0
        %893 = vmatprep.subr.bf16.mxu0 0
        %894 = vmatpush1.bf16.xpose.msra.mxu0 0
        %895 = vmatprep.subr.bf16.mxu0 0
        %896 = vmatpush1.bf16.xpose.msra.mxu0 0
        %897 = vmatprep.subr.bf16.mxu0 0
        %898 = vmatpush1.bf16.xpose.msra.mxu0 0
        %899 = vmatprep.subr.bf16.mxu0 0
        %900 = vmatpush1.bf16.xpose.msra.mxu0 0
        %901 = vmatprep.subr.bf16.mxu0 0
        %902 = vmatpush1.bf16.xpose.msra.mxu0 0
        %903 = vmatprep.subr.bf16.mxu0 0
        %904 = vmatpush1.bf16.xpose.msra.mxu0 0
        %905 = vmatprep.subr.bf16.mxu0 0
        %906 = vmatpush1.bf16.xpose.msra.mxu0 0
        %907 = vmatprep.subr.bf16.mxu0 0
        %908 = vmatpush1.bf16.xpose.msra.mxu0 0
        %909 = vmatprep.mubr.bf16.mxu0 0
        %910 = vmatmul.mubr.bf16.gmra.mrb[0].mxu0 %v872
        %v911 = vpop.f32.mrb[0].mxu0
        %v912 = vadd.f32 0.0, %v911
        %v913 = vpop.f32.mrb[0].mxu0
        %v914 = vpop.f32.mrb[0].mxu0
        %v915 = vpop.f32.mrb[0].mxu0
        %916 = vdwg.mxu0
        %v917 = vsel %vm491, %v912, -inf
        %918 = vmax.xlane.f32.xlu0 %v917
        %v919 = vpop.xlane.xlu0 %918
        %v920 = vsub.f32 %v912, %v919
        %v921 = vmul.f32 %v920, 1.442695
        %v922 = vpow.pop %v921
        %v923 = vsel %vm491, %v922, 0.0
        %924 = vadd.xlane.f32.xlu0 %v923
        %v925 = vpop.xlane.xlu0 %924
        %v926 = vrcp.pop %v925
        %v927 = vpack.c.bf16 %v922, %v922
        %928 = vrot.lane.b32.xlu0 %v868, 72
        %v929 = vpop.permute.xlu0 %928
        %v931 = vsel %vm491, %v927, 0
        %v934 = vsel %vm557, %v929, 0
        %936 = vmatprep.subr.bf16.mxu0 0
        %937 = vmatpush1.bf16.msra.mxu0 %v934
        %938 = vmatprep.subr.bf16.mxu0 0
        %939 = vmatpush1.bf16.msra.mxu0 0
        %940 = vmatprep.subr.bf16.mxu0 0
        %941 = vmatpush1.bf16.msra.mxu0 0
        %942 = vmatprep.subr.bf16.mxu0 0
        %943 = vmatpush1.bf16.msra.mxu0 0
        %944 = vmatprep.subr.bf16.mxu0 0
        %945 = vmatpush1.bf16.msra.mxu0 0
        %946 = vmatprep.subr.bf16.mxu0 0
        %947 = vmatpush1.bf16.msra.mxu0 0
        %948 = vmatprep.subr.bf16.mxu0 0
        %949 = vmatpush1.bf16.msra.mxu0 0
        %950 = vmatprep.subr.bf16.mxu0 0
        %951 = vmatpush1.bf16.msra.mxu0 0
        %952 = vmatprep.subr.bf16.mxu0 0
        %953 = vmatpush1.bf16.msra.mxu0 0
        %954 = vmatprep.subr.bf16.mxu0 0
        %955 = vmatpush1.bf16.msra.mxu0 0
        %956 = vmatprep.subr.bf16.mxu0 0
        %957 = vmatpush1.bf16.msra.mxu0 0
        %958 = vmatprep.subr.bf16.mxu0 0
        %959 = vmatpush1.bf16.msra.mxu0 0
        %960 = vmatprep.subr.bf16.mxu0 0
        %961 = vmatpush1.bf16.msra.mxu0 0
        %962 = vmatprep.subr.bf16.mxu0 0
        %963 = vmatpush1.bf16.msra.mxu0 0
        %964 = vmatprep.subr.bf16.mxu0 0
        %965 = vmatpush1.bf16.msra.mxu0 0
        %966 = vmatprep.subr.bf16.mxu0 0
        %967 = vmatpush1.bf16.msra.mxu0 0
        %968 = vmatprep.mubr.bf16.mxu0 0
        %969 = vmatmul.mubr.bf16.gmra.mrb[0].mxu0 %v931
        %v970 = vpop.f32.mrb[0].mxu0
        %v971 = vadd.f32 0.0, %v970
        %v972 = vpop.f32.mrb[0].mxu0
        %v973 = vpop.f32.mrb[0].mxu0
        %v974 = vpop.f32.mrb[0].mxu0
        %975 = vdwg.mxu0
        %v976 = vmul.f32 %v971, %v926
        %v977 = vpack.c.bf16 %v976, %v976
        %v979 = vunpack.c.l.b16 %v977
        %v980 = vpack.c.b16 %v979, %v979
        %981 = vrot.lane.b32.xlu0 %v980, 24
        %v982 = vpop.permute.xlu0 %981
        %vm984 = vcmask 257216
        %985 = vst.msk [vmem:[#allocation4] sm:$0xf] %vm984, %v982
        %v986 = vld [vmem:[#allocation4] sm:$0xf]
        %v987 = vld [vmem:[%s5] sm:$0xf]
        %v988 = vld [vmem:[%s5 + $0x4] sm:$0xf]
        %v989 = vld [vmem:[%s5 + $0x8] sm:$0xf]
        %v990 = vld [vmem:[%s5 + $0xc] sm:$0xf]
        %v991 = vld [vmem:[%s6] sm:$0x1]
        %v993 = vlaneseq
        %v994 = vshrl.u32 %v993, 7
        %v995 = vsub.s32 0, %v994
        %v996 = vrot.slane %v991, %v995
        %v1002 = vunpack.c.l.b16 %v987
        %v1003 = vunpack.c.l.b16 %v988
        %v1004 = vunpack.c.l.b16 %v989
        %v1005 = vunpack.c.l.b16 %v990
        %v1006 = vpack.c.b16 %v1003, %v1002
        %v1007 = vpack.c.b16 %v1005, %v1004
        %v1011 = vsel %vm442, %v986, 0
        %1013 = vmatprep.subr.bf16.mxu0 0
        %1014 = vmatpush1.bf16.msra.mxu0 %v1006
        %1015 = vmatprep.subr.bf16.mxu0 0
        %1016 = vmatpush1.bf16.msra.mxu0 %v1007
        %1017 = vmatprep.subr.bf16.mxu0 0
        %1018 = vmatpush1.bf16.msra.mxu0 0
        %1019 = vmatprep.subr.bf16.mxu0 0
        %1020 = vmatpush1.bf16.msra.mxu0 0
        %1021 = vmatprep.subr.bf16.mxu0 0
        %1022 = vmatpush1.bf16.msra.mxu0 0
        %1023 = vmatprep.subr.bf16.mxu0 0
        %1024 = vmatpush1.bf16.msra.mxu0 0
        %1025 = vmatprep.subr.bf16.mxu0 0
        %1026 = vmatpush1.bf16.msra.mxu0 0
        %1027 = vmatprep.subr.bf16.mxu0 0
        %1028 = vmatpush1.bf16.msra.mxu0 0
        %1029 = vmatprep.subr.bf16.mxu0 0
        %1030 = vmatpush1.bf16.msra.mxu0 0
        %1031 = vmatprep.subr.bf16.mxu0 0
        %1032 = vmatpush1.bf16.msra.mxu0 0
        %1033 = vmatprep.subr.bf16.mxu0 0
        %1034 = vmatpush1.bf16.msra.mxu0 0
        %1035 = vmatprep.subr.bf16.mxu0 0
        %1036 = vmatpush1.bf16.msra.mxu0 0
        %1037 = vmatprep.subr.bf16.mxu0 0
        %1038 = vmatpush1.bf16.msra.mxu0 0
        %1039 = vmatprep.subr.bf16.mxu0 0
        %1040 = vmatpush1.bf16.msra.mxu0 0
        %1041 = vmatprep.subr.bf16.mxu0 0
        %1042 = vmatpush1.bf16.msra.mxu0 0
        %1043 = vmatprep.subr.bf16.mxu0 0
        %1044 = vmatpush1.bf16.msra.mxu0 0
        %1045 = vmatprep.mubr.bf16.mxu0 0
        %1046 = vmatmul.mubr.bf16.gmra.mrb[0].mxu0 %v1011
        %v1047 = vpop.f32.mrb[0].mxu0
        %v1048 = vadd.f32 %v996, %v1047
        %v1049 = vpop.f32.mrb[0].mxu0
        %v1050 = vpop.f32.mrb[0].mxu0
        %v1051 = vpop.f32.mrb[0].mxu0
        %1052 = vdwg.mxu0
        %1053 = vst.msk [vmem:[%s336] sm:$0xff] %vm442, %v1048
        %s1054 = sand.u32 %s199, 1
        %s1055 = scalar_lea.sflag [#allocation7], %s1054
        %s1056 = sand.u32 %s199, 1
        %s1057 = smul.addr %s1056, 8
        %s1058 = scalar_lea.vmem [#allocation11], %s1057
        // Predicated region
        $region65: #{tpu_custom_call.1} parent=47 // pred_check
          %p1059 = pneg %p209
        $region66: #{tpu_custom_call.1} parent=47 // pred_check_branch
          %1061 = sbr.rel (%p1059) target = $region68
        $region67: #{tpu_custom_call.1} parent=47 // pred_region
          %s1063 = ssub.s32 128, 128
          %1064 = vsyncadd %s1055, %s1063
          %s1065 = sadd.s32 %s30, %s29
          %s1066 = smul.addr %s1065, 128
          %s1067 = scalar_lea.hbm %s7, %s1066
          %s1069 = sshll.u32 %s1058, 4
          %s1070 = int_to_ptr.vmem [resolvable:$true] %s1069
          %1072 = dma.vmem_to_hbm [thread:$0]  %s1070, 128, %s1067, %s1055
        $region68: #{tpu_custom_call.1} parent=47 // pred_fallthru
          _
      $region48: #{tpu_custom_call.1} parent=5 // pred_fallthru
        _
      %p1073 = scmp.le.s32.totalorder 2, %s20
      // Predicated region
      $region69: #{tpu_custom_call.1} parent=5 // pred_check
        %p1074 = pneg %p1073
      $region70: #{tpu_custom_call.1} parent=5 // pred_check_branch
        %1076 = sbr.rel (%p1074) target = $region72
      $region71: #{tpu_custom_call.1} parent=5 // pred_region
        %s1077 = ssub.s32 %s20, 2
        // Predicated region
        $region73: #{tpu_custom_call.1} parent=71 // pred_check
          %p1078 = pneg %p215
        $region74: #{tpu_custom_call.1} parent=71 // pred_check_branch
          %1080 = sbr.rel (%p1078) target = $region76
        $region75: #{tpu_custom_call.1} parent=71 // pred_region
          %s1081 = sand.u32 %s200, 1
          %s1082 = scalar_lea.sflag [#allocation7], %s1081
          %s1083 = sand.u32 %s200, 1
          %s1084 = smul.addr %s1083, 8
          %s1085 = scalar_lea.vmem [#allocation11], %s1084
          %1086 = dma.done %s1082, 128
        $region76: #{tpu_custom_call.1} parent=71 // pred_fallthru
          _
      $region72: #{tpu_custom_call.1} parent=5 // pred_fallthru
        _
    $region6: #{tpu_custom_call.1} parent=1 // loop_footer
      %s24 = sadd.s32 1, %s20
    $region7: #{tpu_custom_call.1} parent=1 // loop_footer_branch
      %19 = sbr.rel target = $region3
    $region8: #{tpu_custom_call.1} parent=1 // loop_exit
      _
    %1087 = vsyncpa [#allocation6], 1
    %s1088 = scalar_lea.sflag [#allocation6], 1
    %1089 = vsyncpa %s1088, 1
    %1090 = vsyncpa [#allocation9], 1
    %1091 = vsyncpa [#allocation7], 1
    %s1092 = scalar_lea.sflag [#allocation7], 1
    %1093 = vsyncpa %s1092, 1

</llo_original>
